<compile_context>
chip_gen: v5e
topology: v5e:2x2
jax: 0.10.0
libtpu: 0.0.40
codegen_flags: <defaults>
</compile_context>

<pallas_src>
import functools

import jax
import jax.numpy as jnp
from jax.experimental import pallas as pl
from jax.experimental.pallas import tpu as pltpu


def make_divisible(v, divisor=8, min_value=None, round_limit=0.9):
    min_value = min_value or divisor
    new_v = max(min_value, int(v + divisor / 2) // divisor * divisor)
    if new_v < round_limit * v:
        new_v += divisor
    return new_v


def _round_up(x, m):
    return ((x + m - 1) // m) * m


_VMEM_BUDGET_BYTES = 20 * 2**20   # live-VMEM target (fits v7x's 32 MiB scoped default)
_VMEM_LIMIT_BYTES = 40 * 2**20    # explicit scoped-VMEM limit (safe on v5e/v6e/v7x)


def _choose_tile_h(H, Wp, W8, cin_p, cmid_p, cout_p,
                   vmem_budget_bytes, target_m_rows=1024):
    """Budget-driven H-tile size (even, >= 2, rebalanced to minimize H pad)."""
    # Live-VMEM bytes that scale with one output row (height 1):
    per_row = (Wp * (2 * cin_p        # haloed input tile (bf16)
                     + 2 * cin_p      # one live row-shifted tap view (bf16)
                     + 4 * cmid_p     # f32 conv_exp accumulator
                     + 2 * cmid_p     # bf16 activations fed to conv_pwl
                     + 4 * cout_p)    # f32 result before the bf16 store
               + 2 * 2 * Wp * cin_p   # double-buffered body input block (bf16)
               + 2 * 2 * W8 * cout_p)  # double-buffered output block (bf16)
    fixed = (2 * (2 * (9 * cin_p * cmid_p + cmid_p * cout_p)   # weights (bf16, dbl-buf)
                  + 4 * (cmid_p + cout_p))                     # biases (f32, dbl-buf)
             + 2 * 2 * 2 * Wp * cin_p)                         # 2-row halo block (dbl-buf)
    th = max(2, (vmem_budget_bytes - fixed) // per_row)
    th = min(th, max(2, -(-target_m_rows // Wp)))   # MXU M-dim target (M = TH*Wp)
    th = min(th, max(2, -(-H // 2)))                # >= 2 H-tiles when possible (megacore)
    th = max(2, (int(th) // 2) * 2)                 # even: halo rows form a 2-row block
    n_tiles = -(-H // th)
    th = max(2, ((-(-H // n_tiles)) + 1) // 2 * 2)  # rebalance to minimize H padding
    return th


def _edge_residual_kernel(body_ref, halo_ref, w9_ref, bexp_ref,
                          wpwl_ref, bpwl_ref, o_ref, *,
                          TH, W8, Wp, has_residual):
    """One (batch, H-tile) grid step.

    body_ref : (1, TH, Wp, Cin_p)  bf16   padded input rows [t*TH, t*TH+TH)
    halo_ref : (1, 2,  Wp, Cin_p)  bf16   padded input rows [t*TH+TH, t*TH+TH+2)
    w9_ref   : (9, Cin_p, Cmid_p)  bf16   conv_exp taps (kh*3+kw), BN scale folded
    bexp_ref : (1, Cmid_p)         f32    folded BN bias after conv_exp
    wpwl_ref : (Cmid_p, Cout_p)    bf16   conv_pwl weights, BN scale folded
    bpwl_ref : (1, Cout_p)         f32    folded BN bias after conv_pwl
    o_ref    : (1, TH, W8, Cout_p) bf16
    """
    cin_p = body_ref.shape[-1]
    cmid_p = w9_ref.shape[-1]
    cout_p = o_ref.shape[-1]
    m_out = TH * Wp

    # Haloed tile (TH+2 rows) plus one zero guard row so every tap's
    # row-shifted view stays in bounds.  The flatten is a layout no-op
    # (Wp % 8 == 0, Cin_p % 128 == 0); this is the only in-VMEM copy left.
    guard = jnp.zeros((1, Wp, cin_p), body_ref.dtype)
    xt = jnp.concatenate([body_ref[0], halo_ref[0], guard], axis=0)
    xf = xt.reshape((TH + 3) * Wp, cin_p)

    # conv_exp (+ folded BN scale): 9 accumulating MXU matmuls, one per tap.
    # Tap (kh, kw) of output (h, w) reads xf[(h*Wp + w) + kh*Wp + kw].
    # Flattened columns w >= W are junk and get dropped by the wrapper.
    # (Per-tap K=Cin_p accumulate is the low-VMEM choice preferred on
    #  v7x/v5e; a per-kw K=3*Cin_p grouping is a possible v6e variant.)
    acc = jnp.zeros((m_out, cmid_p), jnp.float32)
    for kh in range(3):
        for kw in range(3):
            off = kh * Wp + kw
            v = xf[off: off + m_out, :]
            acc = acc + jnp.dot(v, w9_ref[kh * 3 + kw],
                                preferred_element_type=jnp.float32)

    y = acc + bexp_ref[...]                   # folded BN bias
    y = y * jax.nn.sigmoid(y)                 # SiLU, f32 epilogue

    # conv_pwl (+ folded BN scale), no activation.
    z = jnp.dot(y.astype(wpwl_ref.dtype), wpwl_ref[...],
                preferred_element_type=jnp.float32)
    z = z + bpwl_ref[...]

    if has_residual:
        # Shortcut = interior of the already-resident haloed tile
        # (padded row h+1, padded col w+1 -> flat offset Wp + 1).
        res = xf[Wp + 1: Wp + 1 + m_out, :]
        z = z + res.astype(jnp.float32)

    z = z.reshape(TH, Wp, cout_p)
    if W8 < Wp:
        z = z[:, :W8, :]                      # sublane-aligned slice; store unmasked
    o_ref[0] = z.astype(o_ref.dtype)


def edge_residual_forward(x_nchw, params, *, has_residual):
    """x_nchw: (N, Cin, H, W) float32. Returns (N, Cout, H, W) float32."""
    wexp = params["wexp"]          # (3, 3, Cin, Cmid)  HWIO
    sexp = params["sexp"]          # (1, Cmid)
    bexp = params["bexp"]          # (1, Cmid)
    wpwl = params["wpwl"]          # (Cmid, Cout)
    spwl = params["spwl"]          # (1, Cout)
    bpwl = params["bpwl"]          # (1, Cout)

    N, Cin, H, W = x_nchw.shape
    Cmid = wexp.shape[-1]
    Cout = wpwl.shape[-1]
    if has_residual:
        assert Cin == Cout, "residual path requires in_channels == out_channels"

    cin_p = _round_up(Cin, 128)
    cmid_p = _round_up(Cmid, 128)
    cout_p = _round_up(Cout, 128)
    wp = _round_up(W + 2, 8)           # 1 left pad + >=1 right pad + alignment
    w8 = _round_up(W, 8)               # 8-aligned stored output width
    th = _choose_tile_h(H, wp, w8, cin_p, cmid_p, cout_p, _VMEM_BUDGET_BYTES)
    h_pad = _round_up(H, th)
    n_ht = h_pad // th

    # ---- weights: fold BN scale (exact, per output channel), pad, bf16 ----
    w_exp = wexp * sexp[0]                                          # (3,3,Cin,Cmid)
    w_exp = jnp.pad(w_exp, ((0, 0), (0, 0),
                            (0, cin_p - Cin), (0, cmid_p - Cmid)))
    w9 = w_exp.reshape(9, cin_p, cmid_p).astype(jnp.bfloat16)       # tap = kh*3+kw
    w_pwl = jnp.pad(wpwl * spwl[0],
                    ((0, cmid_p - Cmid), (0, cout_p - Cout))).astype(jnp.bfloat16)
    b_exp = jnp.pad(bexp, ((0, 0), (0, cmid_p - Cmid))).astype(jnp.float32)
    b_pwl = jnp.pad(bpwl, ((0, 0), (0, cout_p - Cout))).astype(jnp.float32)

    # ---- input: NCHW->NHWC + bf16 cast + (spatial, channel) zero-pad in one
    #      producer pass (also pads H up to a multiple of TH). ----
    x_nhwc = jnp.transpose(x_nchw, (0, 2, 3, 1)).astype(jnp.bfloat16)
    xp = jnp.pad(x_nhwc, ((0, 0), (1, 1 + h_pad - H),
                          (1, wp - W - 1), (0, cin_p - Cin)))
    # xp: (N, h_pad + 2, Wp, Cin_p) bf16

    kernel = functools.partial(_edge_residual_kernel, TH=th, W8=w8, Wp=wp,
                               has_residual=has_residual)

    out = pl.pallas_call(
        kernel,
        out_shape=jax.ShapeDtypeStruct((N, h_pad, w8, cout_p), jnp.bfloat16),
        grid_spec=pltpu.PrefetchScalarGridSpec(
            num_scalar_prefetch=0,
            grid=(N, n_ht),
            in_specs=[
                # body rows of the haloed tile
                pl.BlockSpec((1, th, wp, cin_p), lambda n, t: (n, t, 0, 0)),
                # 2-row halo (TH is even -> rows [t*TH+TH, t*TH+TH+2) are one
                # aligned 2-row block of the same padded input)
                pl.BlockSpec((1, 2, wp, cin_p),
                             lambda n, t: (n, (t + 1) * (th // 2), 0, 0)),
                # weights / biases: constant index maps -> stay resident
                pl.BlockSpec((9, cin_p, cmid_p), lambda n, t: (0, 0, 0)),
                pl.BlockSpec((1, cmid_p), lambda n, t: (0, 0)),
                pl.BlockSpec((cmid_p, cout_p), lambda n, t: (0, 0)),
                pl.BlockSpec((1, cout_p), lambda n, t: (0, 0)),
            ],
            out_specs=pl.BlockSpec((1, th, w8, cout_p),
                                   lambda n, t: (n, t, 0, 0)),
        ),
        compiler_params=pltpu.CompilerParams(
            dimension_semantics=("parallel", "parallel"),
            vmem_limit_bytes=_VMEM_LIMIT_BYTES),
    )(xp, xp, w9, b_exp, w_pwl, b_pwl)

    out = out[:, :H, :W, :Cout]                          # drop H/W/channel pad
    return jnp.transpose(out, (0, 3, 1, 2)).astype(x_nchw.dtype)


def _fold_bn(gamma, beta, mean, var, eps=1e-5):
    scale = gamma / jnp.sqrt(var + eps)
    bias = beta - mean * scale
    return scale[None, :], bias[None, :]


def _reference(x_nchw, params, *, has_residual):
    # Pure-JAX f32 reference for sanity checking (module semantics).
    x = jnp.transpose(x_nchw, (0, 2, 3, 1))
    y = jax.lax.conv_general_dilated(
        x, params["wexp"], window_strides=(1, 1), padding="SAME",
        dimension_numbers=("NHWC", "HWIO", "NHWC"))
    y = y * params["sexp"][0] + params["bexp"][0]
    y = y * jax.nn.sigmoid(y)
    z = jnp.einsum("nhwc,cd->nhwd", y, params["wpwl"])
    z = z * params["spwl"][0] + params["bpwl"][0]
    if has_residual:
        z = z + x
    return jnp.transpose(z, (0, 3, 1, 2))


if __name__ == "__main__":
    key = jax.random.PRNGKey(0)
    N, Cin, H, W = 2, 4, 16, 16
    Cout = 4
    exp_ratio = 1.0
    Cmid = make_divisible(Cin * exp_ratio)            # -> 8
    stride = 1
    has_residual = (Cin == Cout and stride == 1)      # noskip=False

    keys = jax.random.split(key, 8)
    # conv_exp: PyTorch weight (Cmid, Cin, 3, 3) -> HWIO
    wexp_oihw = jax.random.normal(keys[0], (Cmid, Cin, 3, 3), jnp.float32) * 0.1
    wexp = jnp.transpose(wexp_oihw, (2, 3, 1, 0))
    sexp, bexp = _fold_bn(
        gamma=1.0 + 0.1 * jax.random.normal(keys[1], (Cmid,), jnp.float32),
        beta=0.1 * jax.random.normal(keys[2], (Cmid,), jnp.float32),
        mean=0.05 * jax.random.normal(keys[3], (Cmid,), jnp.float32),
        var=jnp.abs(1.0 + 0.1 * jax.random.normal(keys[4], (Cmid,), jnp.float32)))
    # conv_pwl: PyTorch weight (Cout, Cmid, 1, 1) -> (Cmid, Cout)
    wpwl_oihw = jax.random.normal(keys[5], (Cout, Cmid, 1, 1), jnp.float32) * 0.1
    wpwl = jnp.transpose(wpwl_oihw[:, :, 0, 0], (1, 0))
    spwl, bpwl = _fold_bn(
        gamma=1.0 + 0.1 * jax.random.normal(keys[6], (Cout,), jnp.float32),
        beta=0.1 * jax.random.normal(keys[7], (Cout,), jnp.float32),
        mean=jnp.zeros((Cout,), jnp.float32),
        var=jnp.ones((Cout,), jnp.float32))

    params = dict(wexp=wexp, sexp=sexp, bexp=bexp,
                  wpwl=wpwl, spwl=spwl, bpwl=bpwl)

    x = jax.random.normal(jax.random.PRNGKey(42), (N, Cin, H, W), jnp.float32)

    out = edge_residual_forward(x, params, has_residual=has_residual)
    out = jax.block_until_ready(out)

    ref = _reference(x, params, has_residual=has_residual)
    assert out.shape == (N, Cout, H, W)
    # bf16 matmul operands / bf16 output store vs pure-f32 reference:
    # use a combined abs/rel error check.
    err = float(jnp.max(jnp.abs(out - ref) / (1.0 + jnp.abs(ref))))
    assert err < 5e-2, f"mismatch vs reference: max normalized err {err}"

    print("KERNEL_OK")
</pallas_src>

<mosaic_0001>
module attributes {stable_mosaic.version = 11 : i64} {
  func.func @_edge_residual_kernel(%arg0: i32, %arg1: i32, %arg2: memref<1x8x24x128xbf16, #tpu.memory_space<vmem>>, %arg3: memref<1x2x24x128xbf16, #tpu.memory_space<vmem>>, %arg4: memref<9x128x128xbf16, #tpu.memory_space<vmem>>, %arg5: memref<1x128xf32, #tpu.memory_space<vmem>>, %arg6: memref<128x128xbf16, #tpu.memory_space<vmem>>, %arg7: memref<1x128xf32, #tpu.memory_space<vmem>>, %arg8: memref<1x8x16x128xbf16, #tpu.memory_space<vmem>>) attributes {dimension_semantics = [#tpu.dimension_semantics<parallel>, #tpu.dimension_semantics<parallel>], iteration_bounds = array<i64: 2, 2>, scalar_prefetch = 0 : i64, scratch_operands = 0 : i64, tpu.core_type = #tpu.core_type<tc>, window_params = [{transform_indices = @transform_0, window_bounds = array<i64: 1, 8, 24, 128>}, {transform_indices = @transform_1, window_bounds = array<i64: 1, 2, 24, 128>}, {pipeline_mode = #tpu.pipeline_mode<synchronous>, transform_indices = @transform_2, window_bounds = array<i64: 9, 128, 128>}, {pipeline_mode = #tpu.pipeline_mode<synchronous>, transform_indices = @transform_3, window_bounds = array<i64: 1, 128>}, {pipeline_mode = #tpu.pipeline_mode<synchronous>, transform_indices = @transform_4, window_bounds = array<i64: 128, 128>}, {pipeline_mode = #tpu.pipeline_mode<synchronous>, transform_indices = @transform_5, window_bounds = array<i64: 1, 128>}, {transform_indices = @transform_6, window_bounds = array<i64: 1, 8, 16, 128>}]} {
    %cst = arith.constant 0.000000e+00 : bf16
    %0 = vector.broadcast %cst : bf16 to vector<1x24x128xbf16>
    %c0 = arith.constant 0 : index
    %c0_0 = arith.constant 0 : index
    %c0_1 = arith.constant 0 : index
    %c0_2 = arith.constant 0 : index
    %1 = vector.load %arg2[%c0, %c0_0, %c0_1, %c0_2] : memref<1x8x24x128xbf16, #tpu.memory_space<vmem>>, vector<1x8x24x128xbf16>
    %2 = vector.shape_cast %1 : vector<1x8x24x128xbf16> to vector<8x24x128xbf16>
    %c0_3 = arith.constant 0 : index
    %c0_4 = arith.constant 0 : index
    %c0_5 = arith.constant 0 : index
    %c0_6 = arith.constant 0 : index
    %3 = vector.load %arg3[%c0_3, %c0_4, %c0_5, %c0_6] : memref<1x2x24x128xbf16, #tpu.memory_space<vmem>>, vector<1x2x24x128xbf16>
    %4 = vector.shape_cast %3 : vector<1x2x24x128xbf16> to vector<2x24x128xbf16>
    %5 = tpu.concatenate %2, %4, %0 in 0 : vector<8x24x128xbf16>, vector<2x24x128xbf16>, vector<1x24x128xbf16> -> vector<11x24x128xbf16>
    %6 = vector.shape_cast %5 : vector<11x24x128xbf16> to vector<264x128xbf16>
    %cst_7 = arith.constant 0.000000e+00 : f32
    %7 = vector.broadcast %cst_7 : f32 to vector<192x128xf32>
    %8 = vector.extract_strided_slice %6 {offsets = [0, 0], sizes = [192, 128], strides = [1, 1]} : vector<264x128xbf16> to vector<192x128xbf16>
    %c0_8 = arith.constant 0 : index
    %c0_9 = arith.constant 0 : index
    %c0_10 = arith.constant 0 : index
    %9 = vector.load %arg4[%c0_8, %c0_9, %c0_10] : memref<9x128x128xbf16, #tpu.memory_space<vmem>>, vector<1x128x128xbf16>
    %10 = vector.shape_cast %9 : vector<1x128x128xbf16> to vector<128x128xbf16>
    %cst_11 = arith.constant dense<0.000000e+00> : vector<192x128xf32>
    %11 = tpu.matmul %8, %10, %cst_11 {dimension_numbers = #tpu.dot_dimension_numbers<[1], [0], [0], [1], [0, 0, 1, 1], [], []>} : vector<192x128xbf16>, vector<128x128xbf16>, vector<192x128xf32> -> vector<192x128xf32>
    %12 = arith.addf %7, %11 : vector<192x128xf32>
    %13 = vector.extract_strided_slice %6 {offsets = [1, 0], sizes = [192, 128], strides = [1, 1]} : vector<264x128xbf16> to vector<192x128xbf16>
    %c1 = arith.constant 1 : index
    %c0_12 = arith.constant 0 : index
    %c0_13 = arith.constant 0 : index
    %14 = vector.load %arg4[%c1, %c0_12, %c0_13] : memref<9x128x128xbf16, #tpu.memory_space<vmem>>, vector<1x128x128xbf16>
    %15 = vector.shape_cast %14 : vector<1x128x128xbf16> to vector<128x128xbf16>
    %cst_14 = arith.constant dense<0.000000e+00> : vector<192x128xf32>
    %16 = tpu.matmul %13, %15, %cst_14 {dimension_numbers = #tpu.dot_dimension_numbers<[1], [0], [0], [1], [0, 0, 1, 1], [], []>} : vector<192x128xbf16>, vector<128x128xbf16>, vector<192x128xf32> -> vector<192x128xf32>
    %17 = arith.addf %12, %16 : vector<192x128xf32>
    %18 = vector.extract_strided_slice %6 {offsets = [2, 0], sizes = [192, 128], strides = [1, 1]} : vector<264x128xbf16> to vector<192x128xbf16>
    %c2 = arith.constant 2 : index
    %c0_15 = arith.constant 0 : index
    %c0_16 = arith.constant 0 : index
    %19 = vector.load %arg4[%c2, %c0_15, %c0_16] : memref<9x128x128xbf16, #tpu.memory_space<vmem>>, vector<1x128x128xbf16>
    %20 = vector.shape_cast %19 : vector<1x128x128xbf16> to vector<128x128xbf16>
    %cst_17 = arith.constant dense<0.000000e+00> : vector<192x128xf32>
    %21 = tpu.matmul %18, %20, %cst_17 {dimension_numbers = #tpu.dot_dimension_numbers<[1], [0], [0], [1], [0, 0, 1, 1], [], []>} : vector<192x128xbf16>, vector<128x128xbf16>, vector<192x128xf32> -> vector<192x128xf32>
    %22 = arith.addf %17, %21 : vector<192x128xf32>
    %23 = vector.extract_strided_slice %6 {offsets = [24, 0], sizes = [192, 128], strides = [1, 1]} : vector<264x128xbf16> to vector<192x128xbf16>
    %c3 = arith.constant 3 : index
    %c0_18 = arith.constant 0 : index
    %c0_19 = arith.constant 0 : index
    %24 = vector.load %arg4[%c3, %c0_18, %c0_19] : memref<9x128x128xbf16, #tpu.memory_space<vmem>>, vector<1x128x128xbf16>
    %25 = vector.shape_cast %24 : vector<1x128x128xbf16> to vector<128x128xbf16>
    %cst_20 = arith.constant dense<0.000000e+00> : vector<192x128xf32>
    %26 = tpu.matmul %23, %25, %cst_20 {dimension_numbers = #tpu.dot_dimension_numbers<[1], [0], [0], [1], [0, 0, 1, 1], [], []>} : vector<192x128xbf16>, vector<128x128xbf16>, vector<192x128xf32> -> vector<192x128xf32>
    %27 = arith.addf %22, %26 : vector<192x128xf32>
    %28 = vector.extract_strided_slice %6 {offsets = [25, 0], sizes = [192, 128], strides = [1, 1]} : vector<264x128xbf16> to vector<192x128xbf16>
    %c4 = arith.constant 4 : index
    %c0_21 = arith.constant 0 : index
    %c0_22 = arith.constant 0 : index
    %29 = vector.load %arg4[%c4, %c0_21, %c0_22] : memref<9x128x128xbf16, #tpu.memory_space<vmem>>, vector<1x128x128xbf16>
    %30 = vector.shape_cast %29 : vector<1x128x128xbf16> to vector<128x128xbf16>
    %cst_23 = arith.constant dense<0.000000e+00> : vector<192x128xf32>
    %31 = tpu.matmul %28, %30, %cst_23 {dimension_numbers = #tpu.dot_dimension_numbers<[1], [0], [0], [1], [0, 0, 1, 1], [], []>} : vector<192x128xbf16>, vector<128x128xbf16>, vector<192x128xf32> -> vector<192x128xf32>
    %32 = arith.addf %27, %31 : vector<192x128xf32>
    %33 = vector.extract_strided_slice %6 {offsets = [26, 0], sizes = [192, 128], strides = [1, 1]} : vector<264x128xbf16> to vector<192x128xbf16>
    %c5 = arith.constant 5 : index
    %c0_24 = arith.constant 0 : index
    %c0_25 = arith.constant 0 : index
    %34 = vector.load %arg4[%c5, %c0_24, %c0_25] : memref<9x128x128xbf16, #tpu.memory_space<vmem>>, vector<1x128x128xbf16>
    %35 = vector.shape_cast %34 : vector<1x128x128xbf16> to vector<128x128xbf16>
    %cst_26 = arith.constant dense<0.000000e+00> : vector<192x128xf32>
    %36 = tpu.matmul %33, %35, %cst_26 {dimension_numbers = #tpu.dot_dimension_numbers<[1], [0], [0], [1], [0, 0, 1, 1], [], []>} : vector<192x128xbf16>, vector<128x128xbf16>, vector<192x128xf32> -> vector<192x128xf32>
    %37 = arith.addf %32, %36 : vector<192x128xf32>
    %38 = vector.extract_strided_slice %6 {offsets = [48, 0], sizes = [192, 128], strides = [1, 1]} : vector<264x128xbf16> to vector<192x128xbf16>
    %c6 = arith.constant 6 : index
    %c0_27 = arith.constant 0 : index
    %c0_28 = arith.constant 0 : index
    %39 = vector.load %arg4[%c6, %c0_27, %c0_28] : memref<9x128x128xbf16, #tpu.memory_space<vmem>>, vector<1x128x128xbf16>
    %40 = vector.shape_cast %39 : vector<1x128x128xbf16> to vector<128x128xbf16>
    %cst_29 = arith.constant dense<0.000000e+00> : vector<192x128xf32>
    %41 = tpu.matmul %38, %40, %cst_29 {dimension_numbers = #tpu.dot_dimension_numbers<[1], [0], [0], [1], [0, 0, 1, 1], [], []>} : vector<192x128xbf16>, vector<128x128xbf16>, vector<192x128xf32> -> vector<192x128xf32>
    %42 = arith.addf %37, %41 : vector<192x128xf32>
    %43 = vector.extract_strided_slice %6 {offsets = [49, 0], sizes = [192, 128], strides = [1, 1]} : vector<264x128xbf16> to vector<192x128xbf16>
    %c7 = arith.constant 7 : index
    %c0_30 = arith.constant 0 : index
    %c0_31 = arith.constant 0 : index
    %44 = vector.load %arg4[%c7, %c0_30, %c0_31] : memref<9x128x128xbf16, #tpu.memory_space<vmem>>, vector<1x128x128xbf16>
    %45 = vector.shape_cast %44 : vector<1x128x128xbf16> to vector<128x128xbf16>
    %cst_32 = arith.constant dense<0.000000e+00> : vector<192x128xf32>
    %46 = tpu.matmul %43, %45, %cst_32 {dimension_numbers = #tpu.dot_dimension_numbers<[1], [0], [0], [1], [0, 0, 1, 1], [], []>} : vector<192x128xbf16>, vector<128x128xbf16>, vector<192x128xf32> -> vector<192x128xf32>
    %47 = arith.addf %42, %46 : vector<192x128xf32>
    %48 = vector.extract_strided_slice %6 {offsets = [50, 0], sizes = [192, 128], strides = [1, 1]} : vector<264x128xbf16> to vector<192x128xbf16>
    %c8 = arith.constant 8 : index
    %c0_33 = arith.constant 0 : index
    %c0_34 = arith.constant 0 : index
    %49 = vector.load %arg4[%c8, %c0_33, %c0_34] : memref<9x128x128xbf16, #tpu.memory_space<vmem>>, vector<1x128x128xbf16>
    %50 = vector.shape_cast %49 : vector<1x128x128xbf16> to vector<128x128xbf16>
    %cst_35 = arith.constant dense<0.000000e+00> : vector<192x128xf32>
    %51 = tpu.matmul %48, %50, %cst_35 {dimension_numbers = #tpu.dot_dimension_numbers<[1], [0], [0], [1], [0, 0, 1, 1], [], []>} : vector<192x128xbf16>, vector<128x128xbf16>, vector<192x128xf32> -> vector<192x128xf32>
    %52 = arith.addf %47, %51 : vector<192x128xf32>
    %c0_36 = arith.constant 0 : index
    %c0_37 = arith.constant 0 : index
    %53 = vector.load %arg5[%c0_36, %c0_37] : memref<1x128xf32, #tpu.memory_space<vmem>>, vector<1x128xf32>
    %54 = vector.broadcast %53 : vector<1x128xf32> to vector<192x128xf32>
    %55 = arith.addf %52, %54 : vector<192x128xf32>
    %56 = arith.negf %55 : vector<192x128xf32>
    %57 = math.exp %56 : vector<192x128xf32>
    %cst_38 = arith.constant 1.000000e+00 : f32
    %58 = vector.broadcast %cst_38 : f32 to vector<192x128xf32>
    %59 = arith.addf %58, %57 : vector<192x128xf32>
    %60 = arith.divf %58, %59 : vector<192x128xf32>
    %61 = arith.mulf %55, %60 : vector<192x128xf32>
    %62 = arith.truncf %61 : vector<192x128xf32> to vector<192x128xbf16>
    %c0_39 = arith.constant 0 : index
    %c0_40 = arith.constant 0 : index
    %63 = vector.load %arg6[%c0_39, %c0_40] : memref<128x128xbf16, #tpu.memory_space<vmem>>, vector<128x128xbf16>
    %cst_41 = arith.constant dense<0.000000e+00> : vector<192x128xf32>
    %64 = tpu.matmul %62, %63, %cst_41 {dimension_numbers = #tpu.dot_dimension_numbers<[1], [0], [0], [1], [0, 0, 1, 1], [], []>} : vector<192x128xbf16>, vector<128x128xbf16>, vector<192x128xf32> -> vector<192x128xf32>
    %c0_42 = arith.constant 0 : index
    %c0_43 = arith.constant 0 : index
    %65 = vector.load %arg7[%c0_42, %c0_43] : memref<1x128xf32, #tpu.memory_space<vmem>>, vector<1x128xf32>
    %66 = vector.broadcast %65 : vector<1x128xf32> to vector<192x128xf32>
    %67 = arith.addf %64, %66 : vector<192x128xf32>
    %68 = vector.extract_strided_slice %6 {offsets = [25, 0], sizes = [192, 128], strides = [1, 1]} : vector<264x128xbf16> to vector<192x128xbf16>
    %69 = arith.extf %68 : vector<192x128xbf16> to vector<192x128xf32>
    %70 = arith.addf %67, %69 : vector<192x128xf32>
    %71 = vector.shape_cast %70 : vector<192x128xf32> to vector<8x24x128xf32>
    %72 = vector.extract_strided_slice %71 {offsets = [0, 0, 0], sizes = [8, 16, 128], strides = [1, 1, 1]} : vector<8x24x128xf32> to vector<8x16x128xf32>
    %73 = arith.truncf %72 : vector<8x16x128xf32> to vector<8x16x128xbf16>
    %c0_44 = arith.constant 0 : index
    %c0_45 = arith.constant 0 : index
    %c0_46 = arith.constant 0 : index
    %c0_47 = arith.constant 0 : index
    %74 = vector.load %arg8[%c0_44, %c0_45, %c0_46, %c0_47] : memref<1x8x16x128xbf16, #tpu.memory_space<vmem>>, vector<1x8x16x128xbf16>
    %75 = vector.shape_cast %74 : vector<1x8x16x128xbf16> to vector<8x16x128xbf16>
    %76 = vector.shape_cast %73 : vector<8x16x128xbf16> to vector<1x8x16x128xbf16>
    tpu.vector_store %arg8[%c0_44, %c0_45, %c0_46, %c0_47], %76 {strides = array<i32>} : memref<1x8x16x128xbf16, #tpu.memory_space<vmem>>, vector<1x8x16x128xbf16>,
    return
  }
  func.func @transform_0(%arg0: i32, %arg1: i32) -> (i32, i32, i32, i32) {
    %c0_i32 = arith.constant 0 : i32
    %c0_i32_0 = arith.constant 0 : i32
    %c0_i32_1 = arith.constant 0 : i32
    return %arg0, %arg1, %c0_i32, %c0_i32_0 : i32, i32, i32, i32
  }
  func.func @transform_1(%arg0: i32, %arg1: i32) -> (i32, i32, i32, i32) {
    %c1_i32 = arith.constant 1 : i32
    %0 = arith.addi %arg1, %c1_i32 : i32
    %c4_i32 = arith.constant 4 : i32
    %1 = arith.muli %0, %c4_i32 : i32
    %c0_i32 = arith.constant 0 : i32
    %c0_i32_0 = arith.constant 0 : i32
    %c0_i32_1 = arith.constant 0 : i32
    return %arg0, %1, %c0_i32, %c0_i32_0 : i32, i32, i32, i32
  }
  func.func @transform_2(%arg0: i32, %arg1: i32) -> (i32, i32, i32) {
    %c0_i32 = arith.constant 0 : i32
    %c0_i32_0 = arith.constant 0 : i32
    %c0_i32_1 = arith.constant 0 : i32
    %c0_i32_2 = arith.constant 0 : i32
    return %c0_i32, %c0_i32_0, %c0_i32_1 : i32, i32, i32
  }
  func.func @transform_3(%arg0: i32, %arg1: i32) -> (i32, i32) {
    %c0_i32 = arith.constant 0 : i32
    %c0_i32_0 = arith.constant 0 : i32
    %c0_i32_1 = arith.constant 0 : i32
    return %c0_i32, %c0_i32_0 : i32, i32
  }
  func.func @transform_4(%arg0: i32, %arg1: i32) -> (i32, i32) {
    %c0_i32 = arith.constant 0 : i32
    %c0_i32_0 = arith.constant 0 : i32
    %c0_i32_1 = arith.constant 0 : i32
    return %c0_i32, %c0_i32_0 : i32, i32
  }
  func.func @transform_5(%arg0: i32, %arg1: i32) -> (i32, i32) {
    %c0_i32 = arith.constant 0 : i32
    %c0_i32_0 = arith.constant 0 : i32
    %c0_i32_1 = arith.constant 0 : i32
    return %c0_i32, %c0_i32_0 : i32, i32
  }
  func.func @transform_6(%arg0: i32, %arg1: i32) -> (i32, i32, i32, i32) {
    %c0_i32 = arith.constant 0 : i32
    %c0_i32_0 = arith.constant 0 : i32
    %c0_i32_1 = arith.constant 0 : i32
    return %arg0, %arg1, %c0_i32, %c0_i32_0 : i32, i32, i32, i32
  }
}

</mosaic_0001>

<llo_original>
// kernel: tpu_custom_call.1
$region0: #{tpu_custom_call.1}
  #allocation0 [shape = 'u32[]', space=smem, size = 0x4, offset = 0x4, fixed_abs, tag = 'smem constant byte address 0x4 - core index']
  #allocation1 [shape = 'u32[72,128]{1,0:T(1,128)}', space=vmem, size = 0x9000, scoped, tag = 'internal scratch']
  %s0 = inlined_call_operand.hbm [shape: bf16[2,18,24,128], index: 0, kind: input, shape index: {}]
  %s1 = inlined_call_operand.hbm [shape: bf16[2,18,24,128], index: 1, kind: input, shape index: {}]
  %s2 = inlined_call_operand.hbm [shape: bf16[9,128,128], index: 2, kind: input, shape index: {}]
  %s3 = inlined_call_operand.vmem [shape: f32[1,128], index: 3, kind: input, shape index: {}]
  %s4 = inlined_call_operand.hbm [shape: bf16[128,128], index: 4, kind: input, shape index: {}]
  %s5 = inlined_call_operand.vmem [shape: f32[1,128], index: 5, kind: input, shape index: {}]
  %s6 = inlined_call_operand.hbm [shape: bf16[2,16,16,128], index: 6, kind: output, shape index: {}]
  %s7 = sld [smem:[#allocation0]]
  $region73: #{tpu_custom_call.1} parent=0
    _
  %s9 = ssub.s32 1, %s7
  %s10 = scalar_select 0, %s9, %s7
  $region1: #{tpu_custom_call.1} parent=0
    #allocation2 [shape = 'u8[98304]{0}', space=vmem, size = 0x18000, scoped, tag = 'input window, operand 0']
    #allocation3 [shape = 's32[2]{0}', space=sflag, size = 0x8, scoped, tag = 'scoped memory for tpu_custom_call.1']
    #allocation4 [shape = 's32[2]{0}', space=sflag, size = 0x8, scoped, tag = 'scoped memory for tpu_custom_call.1']
    #allocation5 [shape = 'u8[24576]{0}', space=vmem, size = 0x6000, scoped, tag = 'input window, operand 1']
    #allocation6 [shape = 's32[2]{0}', space=sflag, size = 0x8, scoped, tag = 'scoped memory for tpu_custom_call.1']
    #allocation7 [shape = 'u8[294912]{0}', space=vmem, size = 0x48000, scoped, tag = 'input window, operand 2, single buffered']
    #allocation8 [shape = 'u8[32768]{0}', space=vmem, size = 0x8000, scoped, tag = 'input window, operand 4, single buffered']
    #allocation9 [shape = 's32[1]{0}', space=sflag, size = 0x4, scoped, tag = 'scoped memory for tpu_custom_call.1']
    #allocation10 [shape = 'u8[65536]{0}', space=vmem, size = 0x10000, scoped, tag = 'output window, operand 0']
    %11 = vsyncpa [#allocation3], 0
    %s12 = scalar_lea.sflag [#allocation3], 1
    %13 = vsyncpa %s12, 0
    %14 = vsyncpa [#allocation6], 0
    %s15 = scalar_lea.sflag [#allocation6], 1
    %16 = vsyncpa %s15, 0
    %17 = vsyncpa [#allocation9], 0
    %18 = vsyncpa [#allocation4], 0
    %s19 = scalar_lea.sflag [#allocation4], 1
    %20 = vsyncpa %s19, 0
    loop: start=0, step=1, limit=6
    $region2: #{tpu_custom_call.1} parent=1 // loop_pre_header
      _
    $region3: #{tpu_custom_call.1} parent=1 // loop_header
      %s22 = sphi 0, %s26
      %p23 = scmp.ge.s32.totalorder %s22, 6
      %s29 = sphi 0, %s41
      %s30 = sphi 0, %s37
      %s31 = sphi 0, %s29
      %s32 = sphi 0, %s30
      %s33 = sphi 0, %s31
      %s34 = sphi 0, %s32
      %s46 = sphi 0, %s48
      %s49 = sphi 0, %s46
      %s50 = sphi 0, %s49
      %s66 = sphi 0, %s50
      %s78 = sphi 0, %s80
      %s81 = sphi 0, %s78
      %s82 = sphi 0, %s81
      %s98 = sphi 0, %s82
      %s102 = sphi 0, %s102
      %s104 = sphi 0, %s102
      %s105 = sphi 0, %s104
      %s119 = sphi 0, %s105
      %s123 = sphi 0, %s123
      %s125 = sphi 0, %s123
      %s126 = sphi 0, %s125
      %s140 = sphi 0, %s126
      %s144 = sphi 0, %s144
      %s146 = sphi 0, %s144
      %s147 = sphi 0, %s146
      %s161 = sphi 0, %s147
      %s165 = sphi 0, %s165
      %s167 = sphi 0, %s165
      %s168 = sphi 0, %s167
      %s182 = sphi 0, %s168
      %s190 = sphi 0, %s192
      %s193 = sphi 0, %s190
      %s194 = sphi 0, %s193
      %s210 = sphi 0, %s194
    $region4: #{tpu_custom_call.1} parent=1 // loop_header_branch
      %25 = sbr.rel (%p23) target = $region8
    $region5: #{tpu_custom_call.1} parent=1 // loop_body
      %s27 = ssub.s32 %s22, 1
      %s28 = ssub.s32 %s22, 2
      %s35 = sadd.s32 1, %s30
      %p36 = scmp.ge.s32.totalorder %s35, 2
      %s37 = scalar_select %p36, 0, %s35
      %s38 = sadd.s32 1, %s29
      %s39 = scalar_select %p36, %s38, %s29
      %p40 = scmp.ge.s32.totalorder %s39, 2
      %s41 = scalar_select %p40, 0, %s39
      %s42 = ssub.s32 %s29, %s41
      %s43 = ssub.s32 %s30, %s37
      %s44 = sor.u32 %s42, %s43
      %p45 = scmp.eq.s32.totalorder %s44, 0
      %s47 = sadd.s32 %s46, 1
      %s48 = scalar_select %p45, %s46, %s47
      %p51 = pneg %p45
      %p52 = scmp.eq.s32.totalorder %s22, 3
      %p53 = por %p51, %p52
      %p54 = scmp.ne.s32.totalorder %s46, %s49
      %p55 = scmp.eq.s32.totalorder %s22, 0
      %p56 = por %p54, %p55
      %p57 = scmp.ne.s32.totalorder %s46, %s49
      %p58 = scmp.eq.s32.totalorder %s27, 3
      %p59 = por %p57, %p58
      %p60 = scmp.ne.s32.totalorder %s49, %s50
      %p61 = scmp.eq.s32.totalorder %s27, 0
      %p62 = por %p60, %p61
      %p63 = scmp.ne.s32.totalorder %s49, %s50
      %p64 = scmp.eq.s32.totalorder %s28, 3
      %p65 = por %p63, %p64
      %p67 = scmp.ne.s32.totalorder %s50, %s66
      %p68 = scmp.eq.s32.totalorder %s28, 0
      %p69 = por %p67, %p68
      %s70 = sadd.s32 %s30, 1
      %s71 = smul.u32 %s70, 4
      %s72 = sadd.s32 %s37, 1
      %s73 = smul.u32 %s72, 4
      %s74 = ssub.s32 %s29, %s41
      %s75 = ssub.s32 %s71, %s73
      %s76 = sor.u32 %s74, %s75
      %p77 = scmp.eq.s32.totalorder %s76, 0
      %s79 = sadd.s32 %s78, 1
      %s80 = scalar_select %p77, %s78, %s79
      %p83 = pneg %p77
      %p84 = scmp.eq.s32.totalorder %s22, 3
      %p85 = por %p83, %p84
      %p86 = scmp.ne.s32.totalorder %s78, %s81
      %p87 = scmp.eq.s32.totalorder %s22, 0
      %p88 = por %p86, %p87
      %p89 = scmp.ne.s32.totalorder %s78, %s81
      %p90 = scmp.eq.s32.totalorder %s27, 3
      %p91 = por %p89, %p90
      %p92 = scmp.ne.s32.totalorder %s81, %s82
      %p93 = scmp.eq.s32.totalorder %s27, 0
      %p94 = por %p92, %p93
      %p95 = scmp.ne.s32.totalorder %s81, %s82
      %p96 = scmp.eq.s32.totalorder %s28, 3
      %p97 = por %p95, %p96
      %p99 = scmp.ne.s32.totalorder %s82, %s98
      %p100 = scmp.eq.s32.totalorder %s28, 0
      %p101 = por %p99, %p100
      %s103 = sadd.s32 %s102, 1
      %p106 = scmp.eq.s32.totalorder %s22, 3
      %p107 = scmp.ne.s32.totalorder %s102, %s104
      %p108 = scmp.eq.s32.totalorder %s22, 0
      %p109 = por %p107, %p108
      %p110 = scmp.ne.s32.totalorder %s102, %s104
      %p111 = scmp.eq.s32.totalorder %s27, 3
      %p112 = por %p110, %p111
      %p113 = scmp.ne.s32.totalorder %s104, %s105
      %p114 = scmp.eq.s32.totalorder %s27, 0
      %p115 = por %p113, %p114
      %p116 = scmp.ne.s32.totalorder %s104, %s105
      %p117 = scmp.eq.s32.totalorder %s28, 3
      %p118 = por %p116, %p117
      %p120 = scmp.ne.s32.totalorder %s105, %s119
      %p121 = scmp.eq.s32.totalorder %s28, 0
      %p122 = por %p120, %p121
      %s124 = sadd.s32 %s123, 1
      %p127 = scmp.eq.s32.totalorder %s22, 3
      %p128 = scmp.ne.s32.totalorder %s123, %s125
      %p129 = scmp.eq.s32.totalorder %s22, 0
      %p130 = por %p128, %p129
      %p131 = scmp.ne.s32.totalorder %s123, %s125
      %p132 = scmp.eq.s32.totalorder %s27, 3
      %p133 = por %p131, %p132
      %p134 = scmp.ne.s32.totalorder %s125, %s126
      %p135 = scmp.eq.s32.totalorder %s27, 0
      %p136 = por %p134, %p135
      %p137 = scmp.ne.s32.totalorder %s125, %s126
      %p138 = scmp.eq.s32.totalorder %s28, 3
      %p139 = por %p137, %p138
      %p141 = scmp.ne.s32.totalorder %s126, %s140
      %p142 = scmp.eq.s32.totalorder %s28, 0
      %p143 = por %p141, %p142
      %s145 = sadd.s32 %s144, 1
      %p148 = scmp.eq.s32.totalorder %s22, 3
      %p149 = scmp.ne.s32.totalorder %s144, %s146
      %p150 = scmp.eq.s32.totalorder %s22, 0
      %p151 = por %p149, %p150
      %p152 = scmp.ne.s32.totalorder %s144, %s146
      %p153 = scmp.eq.s32.totalorder %s27, 3
      %p154 = por %p152, %p153
      %p155 = scmp.ne.s32.totalorder %s146, %s147
      %p156 = scmp.eq.s32.totalorder %s27, 0
      %p157 = por %p155, %p156
      %p158 = scmp.ne.s32.totalorder %s146, %s147
      %p159 = scmp.eq.s32.totalorder %s28, 3
      %p160 = por %p158, %p159
      %p162 = scmp.ne.s32.totalorder %s147, %s161
      %p163 = scmp.eq.s32.totalorder %s28, 0
      %p164 = por %p162, %p163
      %s166 = sadd.s32 %s165, 1
      %p169 = scmp.eq.s32.totalorder %s22, 3
      %p170 = scmp.ne.s32.totalorder %s165, %s167
      %p171 = scmp.eq.s32.totalorder %s22, 0
      %p172 = por %p170, %p171
      %p173 = scmp.ne.s32.totalorder %s165, %s167
      %p174 = scmp.eq.s32.totalorder %s27, 3
      %p175 = por %p173, %p174
      %p176 = scmp.ne.s32.totalorder %s167, %s168
      %p177 = scmp.eq.s32.totalorder %s27, 0
      %p178 = por %p176, %p177
      %p179 = scmp.ne.s32.totalorder %s167, %s168
      %p180 = scmp.eq.s32.totalorder %s28, 3
      %p181 = por %p179, %p180
      %p183 = scmp.ne.s32.totalorder %s168, %s182
      %p184 = scmp.eq.s32.totalorder %s28, 0
      %p185 = por %p183, %p184
      %s186 = ssub.s32 %s29, %s41
      %s187 = ssub.s32 %s30, %s37
      %s188 = sor.u32 %s186, %s187
      %p189 = scmp.eq.s32.totalorder %s188, 0
      %s191 = sadd.s32 %s190, 1
      %s192 = scalar_select %p189, %s190, %s191
      %p195 = pneg %p189
      %p196 = scmp.eq.s32.totalorder %s22, 3
      %p197 = por %p195, %p196
      %p198 = scmp.ne.s32.totalorder %s190, %s193
      %p199 = scmp.eq.s32.totalorder %s22, 0
      %p200 = por %p198, %p199
      %p201 = scmp.ne.s32.totalorder %s190, %s193
      %p202 = scmp.eq.s32.totalorder %s27, 3
      %p203 = por %p201, %p202
      %p204 = scmp.ne.s32.totalorder %s193, %s194
      %p205 = scmp.eq.s32.totalorder %s27, 0
      %p206 = por %p204, %p205
      %p207 = scmp.ne.s32.totalorder %s193, %s194
      %p208 = scmp.eq.s32.totalorder %s28, 3
      %p209 = por %p207, %p208
      %p211 = scmp.ne.s32.totalorder %s194, %s210
      %p212 = scmp.eq.s32.totalorder %s28, 0
      %p213 = por %p211, %p212
      %p214 = scmp.le.s32.totalorder 1, %s22
      %p215 = scmp.lt.s32.totalorder %s22, 5
      %p216 = pnand %p214, %p215
      %p217 = pneg %p216
      // Predicated region
      $region9: #{tpu_custom_call.1} parent=5 // pred_check
        _
      $region10: #{tpu_custom_call.1} parent=5 // pred_check_branch
        %219 = sbr.rel (%p216) target = $region12
      $region11: #{tpu_custom_call.1} parent=5 // pred_region
        %s220 = ssub.s32 %s22, 1
        // Predicated region
        $region13: #{tpu_custom_call.1} parent=11 // pred_check
          %p221 = pneg %p115
        $region14: #{tpu_custom_call.1} parent=11 // pred_check_branch
          %223 = sbr.rel (%p221) target = $region16
        $region15: #{tpu_custom_call.1} parent=11 // pred_region
          %225 = vsyncadd [#allocation6], 0
          %s226 = sshll.u32 %s2, 4
          %s227 = int_to_ptr.hbm [resolvable:$true] %s226
          %s228 = sshll.u32 [#allocation7], 4
          %s229 = int_to_ptr.vmem [resolvable:$true] %s228
          %234 = dma.hbm_to_vmem [thread:$0]  %s227, 9216, %s229, [#allocation6], 64, 64, 4
        $region16: #{tpu_custom_call.1} parent=11 // pred_fallthru
          _
        // Predicated region
        $region17: #{tpu_custom_call.1} parent=11 // pred_check
          %p235 = pneg %p136
        $region18: #{tpu_custom_call.1} parent=11 // pred_check_branch
          %237 = sbr.rel (%p235) target = $region20
        $region19: #{tpu_custom_call.1} parent=11 // pred_region
          _
        $region20: #{tpu_custom_call.1} parent=11 // pred_fallthru
          _
        // Predicated region
        $region21: #{tpu_custom_call.1} parent=11 // pred_check
          %p238 = pneg %p157
        $region22: #{tpu_custom_call.1} parent=11 // pred_check_branch
          %240 = sbr.rel (%p238) target = $region24
        $region23: #{tpu_custom_call.1} parent=11 // pred_region
          %242 = vsyncadd [#allocation9], 0
          %s243 = sshll.u32 %s4, 4
          %s244 = int_to_ptr.hbm [resolvable:$true] %s243
          %s245 = sshll.u32 [#allocation8], 4
          %s246 = int_to_ptr.vmem [resolvable:$true] %s245
          %251 = dma.hbm_to_vmem [thread:$0]  %s244, 1024, %s246, [#allocation9], 64, 64, 4
        $region24: #{tpu_custom_call.1} parent=11 // pred_fallthru
          _
        // Predicated region
        $region25: #{tpu_custom_call.1} parent=11 // pred_check
          %p252 = pneg %p178
        $region26: #{tpu_custom_call.1} parent=11 // pred_check_branch
          %254 = sbr.rel (%p252) target = $region28
        $region27: #{tpu_custom_call.1} parent=11 // pred_region
          _
        $region28: #{tpu_custom_call.1} parent=11 // pred_fallthru
          _
      $region12: #{tpu_custom_call.1} parent=5 // pred_fallthru
        _
      %p255 = scmp.lt.s32.totalorder %s22, 4
      // Predicated region
      $region29: #{tpu_custom_call.1} parent=5 // pred_check
        %p256 = pneg %p255
      $region30: #{tpu_custom_call.1} parent=5 // pred_check_branch
        %258 = sbr.rel (%p256) target = $region32
      $region31: #{tpu_custom_call.1} parent=5 // pred_region
        // Predicated region
        $region33: #{tpu_custom_call.1} parent=31 // pred_check
          %p259 = pneg %p56
        $region34: #{tpu_custom_call.1} parent=31 // pred_check_branch
          %261 = sbr.rel (%p259) target = $region36
        $region35: #{tpu_custom_call.1} parent=31 // pred_region
          %s262 = sand.u32 %s46, 1
          %s263 = scalar_lea.sflag [#allocation3], %s262
          %s264 = sand.u32 %s46, 1
          %s265 = smul.addr %s264, 96
          %s266 = scalar_lea.vmem [#allocation2], %s265
          %s267 = smul.u32 8, %s30
          %s268 = ssub.s32 18, %s267
          %p269 = scmp.lt.s32.totalorder %s268, 8
          %s270 = scalar_select %p269, %s268, 8
          %s271 = smul.u32 4, %s270
          %s272 = smul.u32 %s271, 3
          %s273 = ssub.s32 96, %s272
          %s274 = sshll.u32 %s273, 4
          %275 = vsyncadd %s263, %s274
          %p276 = scmp.ne.s32.totalorder 0, %s272
          %s277 = smul.addr %s267, 3
          %s278 = smul.addr %s29, 54
          %s279 = sadd.s32 %s277, %s278
          %s280 = smul.addr %s279, 4
          %s281 = scalar_lea.hbm %s0, %s280
          %s282 = smul.u32 %s270, 3
          %s283 = smul.u32 4, %s282
          %s284 = sshll.u32 %s281, 4
          %s285 = int_to_ptr.hbm [resolvable:$true] %s284
          %s286 = sshll.u32 %s266, 4
          %s287 = int_to_ptr.vmem [resolvable:$true] %s286
          %s288 = sshll.u32 %s283, 4
          %292 = dma.hbm_to_vmem [thread:$0]  (%p276), %s285, %s288, %s287, %s263, 64, 64, 4
        $region36: #{tpu_custom_call.1} parent=31 // pred_fallthru
          _
        // Predicated region
        $region37: #{tpu_custom_call.1} parent=31 // pred_check
          %p293 = pneg %p88
        $region38: #{tpu_custom_call.1} parent=31 // pred_check_branch
          %295 = sbr.rel (%p293) target = $region40
        $region39: #{tpu_custom_call.1} parent=31 // pred_region
          %s296 = sand.u32 %s22, 1
          %s297 = scalar_lea.sflag [#allocation6], %s296
          %s298 = sand.u32 %s78, 1
          %s299 = smul.addr %s298, 24
          %s300 = scalar_lea.vmem [#allocation5], %s299
          %s301 = sadd.s32 %s30, 1
          %s302 = smul.u32 %s301, 4
          %s303 = smul.u32 2, %s302
          %305 = vsyncadd %s297, 0
          %s306 = smul.addr %s303, 3
          %s307 = smul.addr %s29, 54
          %s308 = sadd.s32 %s306, %s307
          %s309 = smul.addr %s308, 4
          %s310 = scalar_lea.hbm %s1, %s309
          %s311 = sshll.u32 %s310, 4
          %s312 = int_to_ptr.hbm [resolvable:$true] %s311
          %s313 = sshll.u32 %s300, 4
          %s314 = int_to_ptr.vmem [resolvable:$true] %s313
          %319 = dma.hbm_to_vmem [thread:$0]  %s312, 384, %s314, %s297, 64, 64, 4
        $region40: #{tpu_custom_call.1} parent=31 // pred_fallthru
          _
      $region32: #{tpu_custom_call.1} parent=5 // pred_fallthru
        _
      %p320 = scmp.le.s32.totalorder 1, %s22
      %p321 = scmp.lt.s32.totalorder %s22, 5
      %p322 = pnand %p320, %p321
      %p323 = pneg %p322
      // Predicated region
      $region41: #{tpu_custom_call.1} parent=5 // pred_check
        _
      $region42: #{tpu_custom_call.1} parent=5 // pred_check_branch
        %325 = sbr.rel (%p322) target = $region44
      $region43: #{tpu_custom_call.1} parent=5 // pred_region
        %s326 = ssub.s32 %s22, 1
        %s327 = sand.u32 %s49, 1
        %s328 = scalar_lea.sflag [#allocation3], %s327
        %s329 = sand.u32 %s49, 1
        %s330 = smul.addr %s329, 96
        %s331 = scalar_lea.vmem [#allocation2], %s330
        // Predicated region
        $region45: #{tpu_custom_call.1} parent=43 // pred_check
          %p332 = pneg %p62
        $region46: #{tpu_custom_call.1} parent=43 // pred_check_branch
          %334 = sbr.rel (%p332) target = $region48
        $region47: #{tpu_custom_call.1} parent=43 // pred_region
          %336 = dma.done %s328, 1536
        $region48: #{tpu_custom_call.1} parent=43 // pred_fallthru
          _
        %s337 = sand.u32 %s27, 1
        %s338 = scalar_lea.sflag [#allocation6], %s337
        %s339 = sand.u32 %s81, 1
        %s340 = smul.addr %s339, 24
        %s341 = scalar_lea.vmem [#allocation5], %s340
        // Predicated region
        $region49: #{tpu_custom_call.1} parent=43 // pred_check
          %p342 = pneg %p94
        $region50: #{tpu_custom_call.1} parent=43 // pred_check_branch
          %344 = sbr.rel (%p342) target = $region52
        $region51: #{tpu_custom_call.1} parent=43 // pred_region
          %346 = dma.done %s338, 384
        $region52: #{tpu_custom_call.1} parent=43 // pred_fallthru
          _
        // Predicated region
        $region53: #{tpu_custom_call.1} parent=43 // pred_check
          %p347 = pneg %p115
        $region54: #{tpu_custom_call.1} parent=43 // pred_check_branch
          %349 = sbr.rel (%p347) target = $region56
        $region55: #{tpu_custom_call.1} parent=43 // pred_region
          %351 = dma.done [#allocation6], 9216
        $region56: #{tpu_custom_call.1} parent=43 // pred_fallthru
          _
        // Predicated region
        $region57: #{tpu_custom_call.1} parent=43 // pred_check
          %p352 = pneg %p157
        $region58: #{tpu_custom_call.1} parent=43 // pred_check_branch
          %354 = sbr.rel (%p352) target = $region60
        $region59: #{tpu_custom_call.1} parent=43 // pred_region
          %356 = dma.done [#allocation9], 1024
        $region60: #{tpu_custom_call.1} parent=43 // pred_fallthru
          _
        %s357 = sand.u32 %s49, 1
        %s358 = scalar_lea.sflag [#allocation3], %s357
        %s359 = sand.u32 %s49, 1
        %s360 = smul.addr %s359, 96
        %s361 = scalar_lea.vmem [#allocation2], %s360
        %p362 = pneg %p62
        %p363 = pneg %p59
        %s364 = sand.u32 %s27, 1
        %s365 = scalar_lea.sflag [#allocation6], %s364
        %s366 = sand.u32 %s81, 1
        %s367 = smul.addr %s366, 24
        %s368 = scalar_lea.vmem [#allocation5], %s367
        %p369 = pneg %p94
        %p370 = pneg %p91
        %p371 = pneg %p115
        %p372 = pneg %p112
        %p373 = pneg %p136
        %p374 = pneg %p133
        %p375 = pneg %p157
        %p376 = pneg %p154
        %p377 = pneg %p178
        %p378 = pneg %p175
        %p379 = pneg %p206
        %p380 = pneg %p203
        %s381 = sand.u32 %s193, 1
        %s382 = scalar_lea.sflag [#allocation4], %s381
        %s383 = sand.u32 %s193, 1
        %s384 = smul.addr %s383, 64
        %s385 = scalar_lea.vmem [#allocation10], %s384
        %s386 = smul.u32 8, %s32
        %s387 = ssub.s32 18, %s386
        %p388 = scmp.lt.s32.totalorder %s387, 8
        %s389 = scalar_select %p388, %s387, 8
        %s390 = smul.u32 4, %s389
        %s391 = smul.u32 %s390, 3
        %s392 = sadd.s32 %s32, 1
        %s393 = smul.u32 %s392, 4
        %s394 = smul.u32 2, %s393
        %s395 = smul.u32 8, %s32
        %v397 = vld [vmem:[%s331] sm:$0xf]
        %v398 = vld [vmem:[%s331 + $0x4] sm:$0xf]
        %v399 = vld [vmem:[%s331 + $0x8] sm:$0xf]
        %v400 = vld [vmem:[%s331 + $0xc] sm:$0xf]
        %v401 = vld [vmem:[%s331 + $0x10] sm:$0xf]
        %v402 = vld [vmem:[%s331 + $0x14] sm:$0xf]
        %v403 = vld [vmem:[%s331 + $0x18] sm:$0xf]
        %v404 = vld [vmem:[%s331 + $0x1c] sm:$0xf]
        %v405 = vld [vmem:[%s331 + $0x20] sm:$0xf]
        %v406 = vld [vmem:[%s331 + $0x24] sm:$0xf]
        %v407 = vld [vmem:[%s331 + $0x28] sm:$0xf]
        %v408 = vld [vmem:[%s331 + $0x2c] sm:$0xf]
        %v409 = vld [vmem:[%s331 + $0x30] sm:$0xf]
        %v410 = vld [vmem:[%s331 + $0x34] sm:$0xf]
        %v411 = vld [vmem:[%s331 + $0x38] sm:$0xf]
        %v412 = vld [vmem:[%s331 + $0x3c] sm:$0xf]
        %v413 = vld [vmem:[%s331 + $0x40] sm:$0xf]
        %v414 = vld [vmem:[%s331 + $0x44] sm:$0xf]
        %v415 = vld [vmem:[%s331 + $0x48] sm:$0xf]
        %v416 = vld [vmem:[%s331 + $0x4c] sm:$0xf]
        %v417 = vld [vmem:[%s331 + $0x50] sm:$0xf]
        %v418 = vld [vmem:[%s331 + $0x54] sm:$0xf]
        %v419 = vld [vmem:[%s331 + $0x58] sm:$0xf]
        %v420 = vld [vmem:[%s331 + $0x5c] sm:$0xf]
        %v421 = vld [vmem:[%s341] sm:$0xf]
        %v422 = vld [vmem:[%s341 + $0x4] sm:$0xf]
        %v423 = vld [vmem:[%s341 + $0x8] sm:$0xf]
        %v424 = vld [vmem:[%s341 + $0xc] sm:$0xf]
        %v425 = vld [vmem:[%s341 + $0x10] sm:$0xf]
        %v426 = vld [vmem:[%s341 + $0x14] sm:$0xf]
        %v427 = vld [vmem:[#allocation7] sm:$0xf]
        %v428 = vld [vmem:[#allocation7 + $0x4] sm:$0xf]
        %v429 = vld [vmem:[#allocation7 + $0x8] sm:$0xf]
        %v430 = vld [vmem:[#allocation7 + $0xc] sm:$0xf]
        %v431 = vld [vmem:[#allocation7 + $0x10] sm:$0xf]
        %v432 = vld [vmem:[#allocation7 + $0x14] sm:$0xf]
        %v433 = vld [vmem:[#allocation7 + $0x18] sm:$0xf]
        %v434 = vld [vmem:[#allocation7 + $0x1c] sm:$0xf]
        %v435 = vld [vmem:[#allocation7 + $0x20] sm:$0xf]
        %v436 = vld [vmem:[#allocation7 + $0x24] sm:$0xf]
        %v437 = vld [vmem:[#allocation7 + $0x28] sm:$0xf]
        %v438 = vld [vmem:[#allocation7 + $0x2c] sm:$0xf]
        %v439 = vld [vmem:[#allocation7 + $0x30] sm:$0xf]
        %v440 = vld [vmem:[#allocation7 + $0x34] sm:$0xf]
        %v441 = vld [vmem:[#allocation7 + $0x38] sm:$0xf]
        %v442 = vld [vmem:[#allocation7 + $0x3c] sm:$0xf]
        %s443 = scalar_lea.vmem [#allocation7], 64
        %v444 = vld [vmem:[%s443] sm:$0xf]
        %v445 = vld [vmem:[%s443 + $0x4] sm:$0xf]
        %v446 = vld [vmem:[%s443 + $0x8] sm:$0xf]
        %v447 = vld [vmem:[%s443 + $0xc] sm:$0xf]
        %v448 = vld [vmem:[%s443 + $0x10] sm:$0xf]
        %v449 = vld [vmem:[%s443 + $0x14] sm:$0xf]
        %v450 = vld [vmem:[%s443 + $0x18] sm:$0xf]
        %v451 = vld [vmem:[%s443 + $0x1c] sm:$0xf]
        %v452 = vld [vmem:[%s443 + $0x20] sm:$0xf]
        %v453 = vld [vmem:[%s443 + $0x24] sm:$0xf]
        %v454 = vld [vmem:[%s443 + $0x28] sm:$0xf]
        %v455 = vld [vmem:[%s443 + $0x2c] sm:$0xf]
        %v456 = vld [vmem:[%s443 + $0x30] sm:$0xf]
        %v457 = vld [vmem:[%s443 + $0x34] sm:$0xf]
        %v458 = vld [vmem:[%s443 + $0x38] sm:$0xf]
        %v459 = vld [vmem:[%s443 + $0x3c] sm:$0xf]
        %v485 = vunpack.c.l.b16 %v397
        %v486 = vunpack.c.l.b16 %v398
        %v487 = vunpack.c.l.b16 %v399
        %v488 = vunpack.c.l.b16 %v400
        %v489 = vunpack.c.l.b16 %v401
        %v490 = vunpack.c.l.b16 %v402
        %v491 = vunpack.c.l.b16 %v403
        %v492 = vunpack.c.l.b16 %v404
        %v493 = vunpack.c.l.b16 %v405
        %v494 = vunpack.c.l.b16 %v406
        %v495 = vunpack.c.l.b16 %v407
        %v496 = vunpack.c.l.b16 %v408
        %v497 = vunpack.c.l.b16 %v409
        %v498 = vunpack.c.l.b16 %v410
        %v499 = vunpack.c.l.b16 %v411
        %v500 = vunpack.c.l.b16 %v412
        %v501 = vunpack.c.l.b16 %v413
        %v502 = vunpack.c.l.b16 %v414
        %v503 = vunpack.c.l.b16 %v415
        %v504 = vunpack.c.l.b16 %v416
        %v505 = vunpack.c.l.b16 %v417
        %v506 = vunpack.c.l.b16 %v418
        %v507 = vunpack.c.l.b16 %v419
        %v508 = vunpack.c.l.b16 %v420
        %v509 = vunpack.c.l.b16 %v421
        %v510 = vpack.c.b16 %v486, %v485
        %v511 = vpack.c.b16 %v488, %v487
        %v512 = vpack.c.b16 %v490, %v489
        %v513 = vpack.c.b16 %v492, %v491
        %v514 = vpack.c.b16 %v494, %v493
        %v515 = vpack.c.b16 %v496, %v495
        %v516 = vpack.c.b16 %v498, %v497
        %v517 = vpack.c.b16 %v500, %v499
        %v518 = vpack.c.b16 %v502, %v501
        %v519 = vpack.c.b16 %v504, %v503
        %v520 = vpack.c.b16 %v506, %v505
        %v521 = vpack.c.b16 %v508, %v507
        %v522 = vpack.c.b16 %v509, %v509
        %vm523 = vsmask.f32 7424
        %v525 = vshrl.u32 %v510, 16
        %v527 = vshll.u32 %v510, 16
        %v529 = vrot.slane %v527, 1
        %v530 = vor.u32 %v525, %v529
        %v532 = vshll.u32 %v511, 16
        %v534 = vrot.slane %v532, 1
        %v535 = vsel %vm523, %v530, %v534
        %v536 = vshrl.u32 %v511, 16
        %v538 = vor.u32 %v536, %v534
        %v540 = vshll.u32 %v512, 16
        %v542 = vrot.slane %v540, 1
        %v543 = vsel %vm523, %v538, %v542
        %v544 = vshrl.u32 %v512, 16
        %v546 = vor.u32 %v544, %v542
        %v548 = vshll.u32 %v513, 16
        %v550 = vrot.slane %v548, 1
        %v551 = vsel %vm523, %v546, %v550
        %v552 = vshrl.u32 %v513, 16
        %v554 = vor.u32 %v552, %v550
        %v556 = vshll.u32 %v514, 16
        %v558 = vrot.slane %v556, 1
        %v559 = vsel %vm523, %v554, %v558
        %v560 = vshrl.u32 %v514, 16
        %v562 = vor.u32 %v560, %v558
        %v564 = vshll.u32 %v515, 16
        %v566 = vrot.slane %v564, 1
        %v567 = vsel %vm523, %v562, %v566
        %v568 = vshrl.u32 %v515, 16
        %v570 = vor.u32 %v568, %v566
        %v572 = vshll.u32 %v516, 16
        %v574 = vrot.slane %v572, 1
        %v575 = vsel %vm523, %v570, %v574
        %v576 = vshrl.u32 %v516, 16
        %v578 = vor.u32 %v576, %v574
        %v580 = vshll.u32 %v517, 16
        %v582 = vrot.slane %v580, 1
        %v583 = vsel %vm523, %v578, %v582
        %v584 = vshrl.u32 %v517, 16
        %v586 = vor.u32 %v584, %v582
        %v588 = vshll.u32 %v518, 16
        %v590 = vrot.slane %v588, 1
        %v591 = vsel %vm523, %v586, %v590
        %v592 = vshrl.u32 %v518, 16
        %v594 = vor.u32 %v592, %v590
        %v596 = vshll.u32 %v519, 16
        %v598 = vrot.slane %v596, 1
        %v599 = vsel %vm523, %v594, %v598
        %v600 = vshrl.u32 %v519, 16
        %v602 = vor.u32 %v600, %v598
        %v604 = vshll.u32 %v520, 16
        %v606 = vrot.slane %v604, 1
        %v607 = vsel %vm523, %v602, %v606
        %v608 = vshrl.u32 %v520, 16
        %v610 = vor.u32 %v608, %v606
        %v612 = vshll.u32 %v521, 16
        %v614 = vrot.slane %v612, 1
        %v615 = vsel %vm523, %v610, %v614
        %v616 = vshrl.u32 %v521, 16
        %v618 = vor.u32 %v616, %v614
        %v620 = vshll.u32 %v522, 16
        %v622 = vrot.slane %v620, 1
        %v623 = vsel %vm523, %v618, %v622
        %v652 = vunpack.c.l.b16 %v444
        %v653 = vunpack.c.l.b16 %v445
        %v654 = vunpack.c.l.b16 %v446
        %v655 = vunpack.c.l.b16 %v447
        %v656 = vunpack.c.l.b16 %v448
        %v657 = vunpack.c.l.b16 %v449
        %v658 = vunpack.c.l.b16 %v450
        %v659 = vunpack.c.l.b16 %v451
        %v660 = vunpack.c.l.b16 %v452
        %v661 = vunpack.c.l.b16 %v453
        %v662 = vunpack.c.l.b16 %v454
        %v663 = vunpack.c.l.b16 %v455
        %v664 = vunpack.c.l.b16 %v456
        %v665 = vunpack.c.l.b16 %v457
        %v666 = vunpack.c.l.b16 %v458
        %v667 = vunpack.c.l.b16 %v459
        %v668 = vpack.c.b16 %v653, %v652
        %v669 = vpack.c.b16 %v655, %v654
        %v670 = vpack.c.b16 %v657, %v656
        %v671 = vpack.c.b16 %v659, %v658
        %v672 = vpack.c.b16 %v661, %v660
        %v673 = vpack.c.b16 %v663, %v662
        %v674 = vpack.c.b16 %v665, %v664
        %v675 = vpack.c.b16 %v667, %v666
        %684 = vmatpush.bf16.msra.mxu0 %v675
        %685 = vmatpush.bf16.msra.mxu0 %v674
        %686 = vmatpush.bf16.msra.mxu0 %v673
        %687 = vmatpush.bf16.msra.mxu0 %v672
        %688 = vmatpush.bf16.msra.mxu0 %v671
        %689 = vmatpush.bf16.msra.mxu0 %v670
        %690 = vmatpush.bf16.msra.mxu0 %v669
        %691 = vmatpush.bf16.msra.mxu0 %v668
        %692 = vmatmul.bf16.gmra.mxu0 %v535
        %v693 = vpop.f32.mrf.mxu0
        %v694 = vadd.f32 0.0, %v693
        %v695 = vpop.f32.mrf.mxu0
        %v696 = vadd.f32 0.0, %v695
        %697 = vmatmul.bf16.gmra.mxu0 %v543
        %v698 = vpop.f32.mrf.mxu0
        %v699 = vadd.f32 0.0, %v698
        %v700 = vpop.f32.mrf.mxu0
        %v701 = vadd.f32 0.0, %v700
        %702 = vmatmul.bf16.gmra.mxu0 %v551
        %v703 = vpop.f32.mrf.mxu0
        %v704 = vadd.f32 0.0, %v703
        %v705 = vpop.f32.mrf.mxu0
        %v706 = vadd.f32 0.0, %v705
        %707 = vmatmul.bf16.gmra.mxu0 %v559
        %v708 = vpop.f32.mrf.mxu0
        %v709 = vadd.f32 0.0, %v708
        %v710 = vpop.f32.mrf.mxu0
        %v711 = vadd.f32 0.0, %v710
        %712 = vmatmul.bf16.gmra.mxu0 %v567
        %v713 = vpop.f32.mrf.mxu0
        %v714 = vadd.f32 0.0, %v713
        %v715 = vpop.f32.mrf.mxu0
        %v716 = vadd.f32 0.0, %v715
        %717 = vmatmul.bf16.gmra.mxu0 %v575
        %v718 = vpop.f32.mrf.mxu0
        %v719 = vadd.f32 0.0, %v718
        %v720 = vpop.f32.mrf.mxu0
        %v721 = vadd.f32 0.0, %v720
        %722 = vmatmul.bf16.gmra.mxu0 %v583
        %v723 = vpop.f32.mrf.mxu0
        %v724 = vadd.f32 0.0, %v723
        %v725 = vpop.f32.mrf.mxu0
        %v726 = vadd.f32 0.0, %v725
        %727 = vmatmul.bf16.gmra.mxu0 %v591
        %v728 = vpop.f32.mrf.mxu0
        %v729 = vadd.f32 0.0, %v728
        %v730 = vpop.f32.mrf.mxu0
        %v731 = vadd.f32 0.0, %v730
        %732 = vmatmul.bf16.gmra.mxu0 %v599
        %v733 = vpop.f32.mrf.mxu0
        %v734 = vadd.f32 0.0, %v733
        %v735 = vpop.f32.mrf.mxu0
        %v736 = vadd.f32 0.0, %v735
        %737 = vmatmul.bf16.gmra.mxu0 %v607
        %v738 = vpop.f32.mrf.mxu0
        %v739 = vadd.f32 0.0, %v738
        %v740 = vpop.f32.mrf.mxu0
        %v741 = vadd.f32 0.0, %v740
        %742 = vmatmul.bf16.gmra.mxu0 %v615
        %v743 = vpop.f32.mrf.mxu0
        %v744 = vadd.f32 0.0, %v743
        %v745 = vpop.f32.mrf.mxu0
        %v746 = vadd.f32 0.0, %v745
        %747 = vmatmul.bf16.gmra.mxu0 %v623
        %v748 = vpop.f32.mrf.mxu0
        %v749 = vadd.f32 0.0, %v748
        %v750 = vpop.f32.mrf.mxu0
        %v751 = vadd.f32 0.0, %v750
        %752 = vdwg.mxu0
        %v781 = vunpack.c.l.b16 %v427
        %v782 = vunpack.c.l.b16 %v428
        %v783 = vunpack.c.l.b16 %v429
        %v784 = vunpack.c.l.b16 %v430
        %v785 = vunpack.c.l.b16 %v431
        %v786 = vunpack.c.l.b16 %v432
        %v787 = vunpack.c.l.b16 %v433
        %v788 = vunpack.c.l.b16 %v434
        %v789 = vunpack.c.l.b16 %v435
        %v790 = vunpack.c.l.b16 %v436
        %v791 = vunpack.c.l.b16 %v437
        %v792 = vunpack.c.l.b16 %v438
        %v793 = vunpack.c.l.b16 %v439
        %v794 = vunpack.c.l.b16 %v440
        %v795 = vunpack.c.l.b16 %v441
        %v796 = vunpack.c.l.b16 %v442
        %v797 = vpack.c.b16 %v782, %v781
        %v798 = vpack.c.b16 %v784, %v783
        %v799 = vpack.c.b16 %v786, %v785
        %v800 = vpack.c.b16 %v788, %v787
        %v801 = vpack.c.b16 %v790, %v789
        %v802 = vpack.c.b16 %v792, %v791
        %v803 = vpack.c.b16 %v794, %v793
        %v804 = vpack.c.b16 %v796, %v795
        %813 = vmatpush.bf16.msra.mxu0 %v804
        %814 = vmatpush.bf16.msra.mxu0 %v803
        %815 = vmatpush.bf16.msra.mxu0 %v802
        %816 = vmatpush.bf16.msra.mxu0 %v801
        %817 = vmatpush.bf16.msra.mxu0 %v800
        %818 = vmatpush.bf16.msra.mxu0 %v799
        %819 = vmatpush.bf16.msra.mxu0 %v798
        %820 = vmatpush.bf16.msra.mxu0 %v797
        %821 = vmatmul.bf16.gmra.mxu0 %v510
        %v822 = vpop.f32.mrf.mxu0
        %v823 = vadd.f32 %v694, %v822
        %v824 = vpop.f32.mrf.mxu0
        %v825 = vadd.f32 %v696, %v824
        %826 = vmatmul.bf16.gmra.mxu0 %v511
        %v827 = vpop.f32.mrf.mxu0
        %v828 = vadd.f32 %v699, %v827
        %v829 = vpop.f32.mrf.mxu0
        %v830 = vadd.f32 %v701, %v829
        %831 = vmatmul.bf16.gmra.mxu0 %v512
        %v832 = vpop.f32.mrf.mxu0
        %v833 = vadd.f32 %v704, %v832
        %v834 = vpop.f32.mrf.mxu0
        %v835 = vadd.f32 %v706, %v834
        %836 = vmatmul.bf16.gmra.mxu0 %v513
        %v837 = vpop.f32.mrf.mxu0
        %v838 = vadd.f32 %v709, %v837
        %v839 = vpop.f32.mrf.mxu0
        %v840 = vadd.f32 %v711, %v839
        %841 = vmatmul.bf16.gmra.mxu0 %v514
        %v842 = vpop.f32.mrf.mxu0
        %v843 = vadd.f32 %v714, %v842
        %v844 = vpop.f32.mrf.mxu0
        %v845 = vadd.f32 %v716, %v844
        %846 = vmatmul.bf16.gmra.mxu0 %v515
        %v847 = vpop.f32.mrf.mxu0
        %v848 = vadd.f32 %v719, %v847
        %v849 = vpop.f32.mrf.mxu0
        %v850 = vadd.f32 %v721, %v849
        %851 = vmatmul.bf16.gmra.mxu0 %v516
        %v852 = vpop.f32.mrf.mxu0
        %v853 = vadd.f32 %v724, %v852
        %v854 = vpop.f32.mrf.mxu0
        %v855 = vadd.f32 %v726, %v854
        %856 = vmatmul.bf16.gmra.mxu0 %v517
        %v857 = vpop.f32.mrf.mxu0
        %v858 = vadd.f32 %v729, %v857
        %v859 = vpop.f32.mrf.mxu0
        %v860 = vadd.f32 %v731, %v859
        %861 = vmatmul.bf16.gmra.mxu0 %v518
        %v862 = vpop.f32.mrf.mxu0
        %v863 = vadd.f32 %v734, %v862
        %v864 = vpop.f32.mrf.mxu0
        %v865 = vadd.f32 %v736, %v864
        %866 = vmatmul.bf16.gmra.mxu0 %v519
        %v867 = vpop.f32.mrf.mxu0
        %v868 = vadd.f32 %v739, %v867
        %v869 = vpop.f32.mrf.mxu0
        %v870 = vadd.f32 %v741, %v869
        %871 = vmatmul.bf16.gmra.mxu0 %v520
        %v872 = vpop.f32.mrf.mxu0
        %v873 = vadd.f32 %v744, %v872
        %v874 = vpop.f32.mrf.mxu0
        %v875 = vadd.f32 %v746, %v874
        %876 = vmatmul.bf16.gmra.mxu0 %v521
        %v877 = vpop.f32.mrf.mxu0
        %v878 = vadd.f32 %v749, %v877
        %v879 = vpop.f32.mrf.mxu0
        %v880 = vadd.f32 %v751, %v879
        %881 = vdwg.mxu0
        %s882 = scalar_lea.vmem [#allocation7], 128
        %v883 = vld [vmem:[%s882] sm:$0xf]
        %v884 = vld [vmem:[%s882 + $0x4] sm:$0xf]
        %v885 = vld [vmem:[%s882 + $0x8] sm:$0xf]
        %v886 = vld [vmem:[%s882 + $0xc] sm:$0xf]
        %v887 = vld [vmem:[%s882 + $0x10] sm:$0xf]
        %v888 = vld [vmem:[%s882 + $0x14] sm:$0xf]
        %v889 = vld [vmem:[%s882 + $0x18] sm:$0xf]
        %v890 = vld [vmem:[%s882 + $0x1c] sm:$0xf]
        %v891 = vld [vmem:[%s882 + $0x20] sm:$0xf]
        %v892 = vld [vmem:[%s882 + $0x24] sm:$0xf]
        %v893 = vld [vmem:[%s882 + $0x28] sm:$0xf]
        %v894 = vld [vmem:[%s882 + $0x2c] sm:$0xf]
        %v895 = vld [vmem:[%s882 + $0x30] sm:$0xf]
        %v896 = vld [vmem:[%s882 + $0x34] sm:$0xf]
        %v897 = vld [vmem:[%s882 + $0x38] sm:$0xf]
        %v898 = vld [vmem:[%s882 + $0x3c] sm:$0xf]
        %vm899 = vcmask 1046528
        %v900 = vrot.slane %v510, 1
        %v901 = vrot.slane %v511, 1
        %v902 = vsel %vm899, %v900, %v901
        %v903 = vrot.slane %v512, 1
        %v904 = vsel %vm899, %v901, %v903
        %v905 = vrot.slane %v513, 1
        %v906 = vsel %vm899, %v903, %v905
        %v907 = vrot.slane %v514, 1
        %v908 = vsel %vm899, %v905, %v907
        %v909 = vrot.slane %v515, 1
        %v910 = vsel %vm899, %v907, %v909
        %v911 = vrot.slane %v516, 1
        %v912 = vsel %vm899, %v909, %v911
        %v913 = vrot.slane %v517, 1
        %v914 = vsel %vm899, %v911, %v913
        %v915 = vrot.slane %v518, 1
        %v916 = vsel %vm899, %v913, %v915
        %v917 = vrot.slane %v519, 1
        %v918 = vsel %vm899, %v915, %v917
        %v919 = vrot.slane %v520, 1
        %v920 = vsel %vm899, %v917, %v919
        %v921 = vrot.slane %v521, 1
        %v922 = vsel %vm899, %v919, %v921
        %v923 = vrot.slane %v522, 1
        %v924 = vsel %vm899, %v921, %v923
        %v953 = vunpack.c.l.b16 %v883
        %v954 = vunpack.c.l.b16 %v884
        %v955 = vunpack.c.l.b16 %v885
        %v956 = vunpack.c.l.b16 %v886
        %v957 = vunpack.c.l.b16 %v887
        %v958 = vunpack.c.l.b16 %v888
        %v959 = vunpack.c.l.b16 %v889
        %v960 = vunpack.c.l.b16 %v890
        %v961 = vunpack.c.l.b16 %v891
        %v962 = vunpack.c.l.b16 %v892
        %v963 = vunpack.c.l.b16 %v893
        %v964 = vunpack.c.l.b16 %v894
        %v965 = vunpack.c.l.b16 %v895
        %v966 = vunpack.c.l.b16 %v896
        %v967 = vunpack.c.l.b16 %v897
        %v968 = vunpack.c.l.b16 %v898
        %v969 = vpack.c.b16 %v954, %v953
        %v970 = vpack.c.b16 %v956, %v955
        %v971 = vpack.c.b16 %v958, %v957
        %v972 = vpack.c.b16 %v960, %v959
        %v973 = vpack.c.b16 %v962, %v961
        %v974 = vpack.c.b16 %v964, %v963
        %v975 = vpack.c.b16 %v966, %v965
        %v976 = vpack.c.b16 %v968, %v967
        %985 = vmatpush.bf16.msra.mxu0 %v976
        %986 = vmatpush.bf16.msra.mxu0 %v975
        %987 = vmatpush.bf16.msra.mxu0 %v974
        %988 = vmatpush.bf16.msra.mxu0 %v973
        %989 = vmatpush.bf16.msra.mxu0 %v972
        %990 = vmatpush.bf16.msra.mxu0 %v971
        %991 = vmatpush.bf16.msra.mxu0 %v970
        %992 = vmatpush.bf16.msra.mxu0 %v969
        %993 = vmatmul.bf16.gmra.mxu0 %v902
        %v994 = vpop.f32.mrf.mxu0
        %v995 = vadd.f32 0.0, %v994
        %v996 = vpop.f32.mrf.mxu0
        %v997 = vadd.f32 0.0, %v996
        %998 = vmatmul.bf16.gmra.mxu0 %v904
        %v999 = vpop.f32.mrf.mxu0
        %v1000 = vadd.f32 0.0, %v999
        %v1001 = vpop.f32.mrf.mxu0
        %v1002 = vadd.f32 0.0, %v1001
        %1003 = vmatmul.bf16.gmra.mxu0 %v906
        %v1004 = vpop.f32.mrf.mxu0
        %v1005 = vadd.f32 0.0, %v1004
        %v1006 = vpop.f32.mrf.mxu0
        %v1007 = vadd.f32 0.0, %v1006
        %1008 = vmatmul.bf16.gmra.mxu0 %v908
        %v1009 = vpop.f32.mrf.mxu0
        %v1010 = vadd.f32 0.0, %v1009
        %v1011 = vpop.f32.mrf.mxu0
        %v1012 = vadd.f32 0.0, %v1011
        %1013 = vmatmul.bf16.gmra.mxu0 %v910
        %v1014 = vpop.f32.mrf.mxu0
        %v1015 = vadd.f32 0.0, %v1014
        %v1016 = vpop.f32.mrf.mxu0
        %v1017 = vadd.f32 0.0, %v1016
        %1018 = vmatmul.bf16.gmra.mxu0 %v912
        %v1019 = vpop.f32.mrf.mxu0
        %v1020 = vadd.f32 0.0, %v1019
        %v1021 = vpop.f32.mrf.mxu0
        %v1022 = vadd.f32 0.0, %v1021
        %1023 = vmatmul.bf16.gmra.mxu0 %v914
        %v1024 = vpop.f32.mrf.mxu0
        %v1025 = vadd.f32 0.0, %v1024
        %v1026 = vpop.f32.mrf.mxu0
        %v1027 = vadd.f32 0.0, %v1026
        %1028 = vmatmul.bf16.gmra.mxu0 %v916
        %v1029 = vpop.f32.mrf.mxu0
        %v1030 = vadd.f32 0.0, %v1029
        %v1031 = vpop.f32.mrf.mxu0
        %v1032 = vadd.f32 0.0, %v1031
        %1033 = vmatmul.bf16.gmra.mxu0 %v918
        %v1034 = vpop.f32.mrf.mxu0
        %v1035 = vadd.f32 0.0, %v1034
        %v1036 = vpop.f32.mrf.mxu0
        %v1037 = vadd.f32 0.0, %v1036
        %1038 = vmatmul.bf16.gmra.mxu0 %v920
        %v1039 = vpop.f32.mrf.mxu0
        %v1040 = vadd.f32 0.0, %v1039
        %v1041 = vpop.f32.mrf.mxu0
        %v1042 = vadd.f32 0.0, %v1041
        %1043 = vmatmul.bf16.gmra.mxu0 %v922
        %v1044 = vpop.f32.mrf.mxu0
        %v1045 = vadd.f32 0.0, %v1044
        %v1046 = vpop.f32.mrf.mxu0
        %v1047 = vadd.f32 0.0, %v1046
        %1048 = vmatmul.bf16.gmra.mxu0 %v924
        %v1049 = vpop.f32.mrf.mxu0
        %v1050 = vadd.f32 0.0, %v1049
        %v1051 = vpop.f32.mrf.mxu0
        %v1052 = vadd.f32 0.0, %v1051
        %1053 = vdwg.mxu0
        %v1054 = vadd.f32 %v823, %v995
        %v1055 = vadd.f32 %v825, %v997
        %v1056 = vadd.f32 %v828, %v1000
        %v1057 = vadd.f32 %v830, %v1002
        %v1058 = vadd.f32 %v833, %v1005
        %v1059 = vadd.f32 %v835, %v1007
        %v1060 = vadd.f32 %v838, %v1010
        %v1061 = vadd.f32 %v840, %v1012
        %v1062 = vadd.f32 %v843, %v1015
        %v1063 = vadd.f32 %v845, %v1017
        %v1064 = vadd.f32 %v848, %v1020
        %v1065 = vadd.f32 %v850, %v1022
        %v1066 = vadd.f32 %v853, %v1025
        %v1067 = vadd.f32 %v855, %v1027
        %v1068 = vadd.f32 %v858, %v1030
        %v1069 = vadd.f32 %v860, %v1032
        %v1070 = vadd.f32 %v863, %v1035
        %v1071 = vadd.f32 %v865, %v1037
        %v1072 = vadd.f32 %v868, %v1040
        %v1073 = vadd.f32 %v870, %v1042
        %v1074 = vadd.f32 %v873, %v1045
        %v1075 = vadd.f32 %v875, %v1047
        %v1076 = vadd.f32 %v878, %v1050
        %v1077 = vadd.f32 %v880, %v1052
        %s1078 = scalar_lea.vmem [#allocation7], 192
        %v1079 = vld [vmem:[%s1078] sm:$0xf]
        %v1080 = vld [vmem:[%s1078 + $0x4] sm:$0xf]
        %v1081 = vld [vmem:[%s1078 + $0x8] sm:$0xf]
        %v1082 = vld [vmem:[%s1078 + $0xc] sm:$0xf]
        %v1083 = vld [vmem:[%s1078 + $0x10] sm:$0xf]
        %v1084 = vld [vmem:[%s1078 + $0x14] sm:$0xf]
        %v1085 = vld [vmem:[%s1078 + $0x18] sm:$0xf]
        %v1086 = vld [vmem:[%s1078 + $0x1c] sm:$0xf]
        %v1087 = vld [vmem:[%s1078 + $0x20] sm:$0xf]
        %v1088 = vld [vmem:[%s1078 + $0x24] sm:$0xf]
        %v1089 = vld [vmem:[%s1078 + $0x28] sm:$0xf]
        %v1090 = vld [vmem:[%s1078 + $0x2c] sm:$0xf]
        %v1091 = vld [vmem:[%s1078 + $0x30] sm:$0xf]
        %v1092 = vld [vmem:[%s1078 + $0x34] sm:$0xf]
        %v1093 = vld [vmem:[%s1078 + $0x38] sm:$0xf]
        %v1094 = vld [vmem:[%s1078 + $0x3c] sm:$0xf]
        %v1097 = vunpack.c.l.b16 %v422
        %v1098 = vunpack.c.l.b16 %v423
        %v1099 = vpack.c.b16 %v489, %v488
        %v1100 = vpack.c.b16 %v491, %v490
        %v1101 = vpack.c.b16 %v493, %v492
        %v1102 = vpack.c.b16 %v495, %v494
        %v1103 = vpack.c.b16 %v497, %v496
        %v1104 = vpack.c.b16 %v499, %v498
        %v1105 = vpack.c.b16 %v501, %v500
        %v1106 = vpack.c.b16 %v503, %v502
        %v1107 = vpack.c.b16 %v505, %v504
        %v1108 = vpack.c.b16 %v507, %v506
        %v1109 = vpack.c.b16 %v509, %v508
        %v1110 = vpack.c.b16 %v1098, %v1097
        %v1139 = vunpack.c.l.b16 %v1079
        %v1140 = vunpack.c.l.b16 %v1080
        %v1141 = vunpack.c.l.b16 %v1081
        %v1142 = vunpack.c.l.b16 %v1082
        %v1143 = vunpack.c.l.b16 %v1083
        %v1144 = vunpack.c.l.b16 %v1084
        %v1145 = vunpack.c.l.b16 %v1085
        %v1146 = vunpack.c.l.b16 %v1086
        %v1147 = vunpack.c.l.b16 %v1087
        %v1148 = vunpack.c.l.b16 %v1088
        %v1149 = vunpack.c.l.b16 %v1089
        %v1150 = vunpack.c.l.b16 %v1090
        %v1151 = vunpack.c.l.b16 %v1091
        %v1152 = vunpack.c.l.b16 %v1092
        %v1153 = vunpack.c.l.b16 %v1093
        %v1154 = vunpack.c.l.b16 %v1094
        %v1155 = vpack.c.b16 %v1140, %v1139
        %v1156 = vpack.c.b16 %v1142, %v1141
        %v1157 = vpack.c.b16 %v1144, %v1143
        %v1158 = vpack.c.b16 %v1146, %v1145
        %v1159 = vpack.c.b16 %v1148, %v1147
        %v1160 = vpack.c.b16 %v1150, %v1149
        %v1161 = vpack.c.b16 %v1152, %v1151
        %v1162 = vpack.c.b16 %v1154, %v1153
        %1171 = vmatpush.bf16.msra.mxu0 %v1162
        %1172 = vmatpush.bf16.msra.mxu0 %v1161
        %1173 = vmatpush.bf16.msra.mxu0 %v1160
        %1174 = vmatpush.bf16.msra.mxu0 %v1159
        %1175 = vmatpush.bf16.msra.mxu0 %v1158
        %1176 = vmatpush.bf16.msra.mxu0 %v1157
        %1177 = vmatpush.bf16.msra.mxu0 %v1156
        %1178 = vmatpush.bf16.msra.mxu0 %v1155
        %1179 = vmatmul.bf16.gmra.mxu0 %v1099
        %v1180 = vpop.f32.mrf.mxu0
        %v1181 = vadd.f32 0.0, %v1180
        %v1182 = vpop.f32.mrf.mxu0
        %v1183 = vadd.f32 0.0, %v1182
        %1184 = vmatmul.bf16.gmra.mxu0 %v1100
        %v1185 = vpop.f32.mrf.mxu0
        %v1186 = vadd.f32 0.0, %v1185
        %v1187 = vpop.f32.mrf.mxu0
        %v1188 = vadd.f32 0.0, %v1187
        %1189 = vmatmul.bf16.gmra.mxu0 %v1101
        %v1190 = vpop.f32.mrf.mxu0
        %v1191 = vadd.f32 0.0, %v1190
        %v1192 = vpop.f32.mrf.mxu0
        %v1193 = vadd.f32 0.0, %v1192
        %1194 = vmatmul.bf16.gmra.mxu0 %v1102
        %v1195 = vpop.f32.mrf.mxu0
        %v1196 = vadd.f32 0.0, %v1195
        %v1197 = vpop.f32.mrf.mxu0
        %v1198 = vadd.f32 0.0, %v1197
        %1199 = vmatmul.bf16.gmra.mxu0 %v1103
        %v1200 = vpop.f32.mrf.mxu0
        %v1201 = vadd.f32 0.0, %v1200
        %v1202 = vpop.f32.mrf.mxu0
        %v1203 = vadd.f32 0.0, %v1202
        %1204 = vmatmul.bf16.gmra.mxu0 %v1104
        %v1205 = vpop.f32.mrf.mxu0
        %v1206 = vadd.f32 0.0, %v1205
        %v1207 = vpop.f32.mrf.mxu0
        %v1208 = vadd.f32 0.0, %v1207
        %1209 = vmatmul.bf16.gmra.mxu0 %v1105
        %v1210 = vpop.f32.mrf.mxu0
        %v1211 = vadd.f32 0.0, %v1210
        %v1212 = vpop.f32.mrf.mxu0
        %v1213 = vadd.f32 0.0, %v1212
        %1214 = vmatmul.bf16.gmra.mxu0 %v1106
        %v1215 = vpop.f32.mrf.mxu0
        %v1216 = vadd.f32 0.0, %v1215
        %v1217 = vpop.f32.mrf.mxu0
        %v1218 = vadd.f32 0.0, %v1217
        %1219 = vmatmul.bf16.gmra.mxu0 %v1107
        %v1220 = vpop.f32.mrf.mxu0
        %v1221 = vadd.f32 0.0, %v1220
        %v1222 = vpop.f32.mrf.mxu0
        %v1223 = vadd.f32 0.0, %v1222
        %1224 = vmatmul.bf16.gmra.mxu0 %v1108
        %v1225 = vpop.f32.mrf.mxu0
        %v1226 = vadd.f32 0.0, %v1225
        %v1227 = vpop.f32.mrf.mxu0
        %v1228 = vadd.f32 0.0, %v1227
        %1229 = vmatmul.bf16.gmra.mxu0 %v1109
        %v1230 = vpop.f32.mrf.mxu0
        %v1231 = vadd.f32 0.0, %v1230
        %v1232 = vpop.f32.mrf.mxu0
        %v1233 = vadd.f32 0.0, %v1232
        %1234 = vmatmul.bf16.gmra.mxu0 %v1110
        %v1235 = vpop.f32.mrf.mxu0
        %v1236 = vadd.f32 0.0, %v1235
        %v1237 = vpop.f32.mrf.mxu0
        %v1238 = vadd.f32 0.0, %v1237
        %1239 = vdwg.mxu0
        %v1240 = vadd.f32 %v1054, %v1181
        %v1241 = vadd.f32 %v1055, %v1183
        %v1242 = vadd.f32 %v1056, %v1186
        %v1243 = vadd.f32 %v1057, %v1188
        %v1244 = vadd.f32 %v1058, %v1191
        %v1245 = vadd.f32 %v1059, %v1193
        %v1246 = vadd.f32 %v1060, %v1196
        %v1247 = vadd.f32 %v1061, %v1198
        %v1248 = vadd.f32 %v1062, %v1201
        %v1249 = vadd.f32 %v1063, %v1203
        %v1250 = vadd.f32 %v1064, %v1206
        %v1251 = vadd.f32 %v1065, %v1208
        %v1252 = vadd.f32 %v1066, %v1211
        %v1253 = vadd.f32 %v1067, %v1213
        %v1254 = vadd.f32 %v1068, %v1216
        %v1255 = vadd.f32 %v1069, %v1218
        %v1256 = vadd.f32 %v1070, %v1221
        %v1257 = vadd.f32 %v1071, %v1223
        %v1258 = vadd.f32 %v1072, %v1226
        %v1259 = vadd.f32 %v1073, %v1228
        %v1260 = vadd.f32 %v1074, %v1231
        %v1261 = vadd.f32 %v1075, %v1233
        %v1262 = vadd.f32 %v1076, %v1236
        %v1263 = vadd.f32 %v1077, %v1238
        %s1264 = scalar_lea.vmem [#allocation7], 256
        %v1265 = vld [vmem:[%s1264] sm:$0xf]
        %v1266 = vld [vmem:[%s1264 + $0x4] sm:$0xf]
        %v1267 = vld [vmem:[%s1264 + $0x8] sm:$0xf]
        %v1268 = vld [vmem:[%s1264 + $0xc] sm:$0xf]
        %v1269 = vld [vmem:[%s1264 + $0x10] sm:$0xf]
        %v1270 = vld [vmem:[%s1264 + $0x14] sm:$0xf]
        %v1271 = vld [vmem:[%s1264 + $0x18] sm:$0xf]
        %v1272 = vld [vmem:[%s1264 + $0x1c] sm:$0xf]
        %v1273 = vld [vmem:[%s1264 + $0x20] sm:$0xf]
        %v1274 = vld [vmem:[%s1264 + $0x24] sm:$0xf]
        %v1275 = vld [vmem:[%s1264 + $0x28] sm:$0xf]
        %v1276 = vld [vmem:[%s1264 + $0x2c] sm:$0xf]
        %v1277 = vld [vmem:[%s1264 + $0x30] sm:$0xf]
        %v1278 = vld [vmem:[%s1264 + $0x34] sm:$0xf]
        %v1279 = vld [vmem:[%s1264 + $0x38] sm:$0xf]
        %v1280 = vld [vmem:[%s1264 + $0x3c] sm:$0xf]
        %v1282 = vunpack.c.l.b16 %v424
        %v1283 = vpack.c.b16 %v1282, %v1282
        %v1285 = vshrl.u32 %v1099, 16
        %v1287 = vshll.u32 %v1099, 16
        %v1289 = vrot.slane %v1287, 1
        %v1290 = vor.u32 %v1285, %v1289
        %v1292 = vshll.u32 %v1100, 16
        %v1294 = vrot.slane %v1292, 1
        %v1295 = vsel %vm523, %v1290, %v1294
        %v1296 = vshrl.u32 %v1100, 16
        %v1298 = vor.u32 %v1296, %v1294
        %v1300 = vshll.u32 %v1101, 16
        %v1302 = vrot.slane %v1300, 1
        %v1303 = vsel %vm523, %v1298, %v1302
        %v1304 = vshrl.u32 %v1101, 16
        %v1306 = vor.u32 %v1304, %v1302
        %v1308 = vshll.u32 %v1102, 16
        %v1310 = vrot.slane %v1308, 1
        %v1311 = vsel %vm523, %v1306, %v1310
        %v1312 = vshrl.u32 %v1102, 16
        %v1314 = vor.u32 %v1312, %v1310
        %v1316 = vshll.u32 %v1103, 16
        %v1318 = vrot.slane %v1316, 1
        %v1319 = vsel %vm523, %v1314, %v1318
        %v1320 = vshrl.u32 %v1103, 16
        %v1322 = vor.u32 %v1320, %v1318
        %v1324 = vshll.u32 %v1104, 16
        %v1326 = vrot.slane %v1324, 1
        %v1327 = vsel %vm523, %v1322, %v1326
        %v1328 = vshrl.u32 %v1104, 16
        %v1330 = vor.u32 %v1328, %v1326
        %v1332 = vshll.u32 %v1105, 16
        %v1334 = vrot.slane %v1332, 1
        %v1335 = vsel %vm523, %v1330, %v1334
        %v1336 = vshrl.u32 %v1105, 16
        %v1338 = vor.u32 %v1336, %v1334
        %v1340 = vshll.u32 %v1106, 16
        %v1342 = vrot.slane %v1340, 1
        %v1343 = vsel %vm523, %v1338, %v1342
        %v1344 = vshrl.u32 %v1106, 16
        %v1346 = vor.u32 %v1344, %v1342
        %v1348 = vshll.u32 %v1107, 16
        %v1350 = vrot.slane %v1348, 1
        %v1351 = vsel %vm523, %v1346, %v1350
        %v1352 = vshrl.u32 %v1107, 16
        %v1354 = vor.u32 %v1352, %v1350
        %v1356 = vshll.u32 %v1108, 16
        %v1358 = vrot.slane %v1356, 1
        %v1359 = vsel %vm523, %v1354, %v1358
        %v1360 = vshrl.u32 %v1108, 16
        %v1362 = vor.u32 %v1360, %v1358
        %v1364 = vshll.u32 %v1109, 16
        %v1366 = vrot.slane %v1364, 1
        %v1367 = vsel %vm523, %v1362, %v1366
        %v1368 = vshrl.u32 %v1109, 16
        %v1370 = vor.u32 %v1368, %v1366
        %v1372 = vshll.u32 %v1110, 16
        %v1374 = vrot.slane %v1372, 1
        %v1375 = vsel %vm523, %v1370, %v1374
        %v1376 = vshrl.u32 %v1110, 16
        %v1378 = vor.u32 %v1376, %v1374
        %v1380 = vshll.u32 %v1283, 16
        %v1382 = vrot.slane %v1380, 1
        %v1383 = vsel %vm523, %v1378, %v1382
        %v1412 = vunpack.c.l.b16 %v1265
        %v1413 = vunpack.c.l.b16 %v1266
        %v1414 = vunpack.c.l.b16 %v1267
        %v1415 = vunpack.c.l.b16 %v1268
        %v1416 = vunpack.c.l.b16 %v1269
        %v1417 = vunpack.c.l.b16 %v1270
        %v1418 = vunpack.c.l.b16 %v1271
        %v1419 = vunpack.c.l.b16 %v1272
        %v1420 = vunpack.c.l.b16 %v1273
        %v1421 = vunpack.c.l.b16 %v1274
        %v1422 = vunpack.c.l.b16 %v1275
        %v1423 = vunpack.c.l.b16 %v1276
        %v1424 = vunpack.c.l.b16 %v1277
        %v1425 = vunpack.c.l.b16 %v1278
        %v1426 = vunpack.c.l.b16 %v1279
        %v1427 = vunpack.c.l.b16 %v1280
        %v1428 = vpack.c.b16 %v1413, %v1412
        %v1429 = vpack.c.b16 %v1415, %v1414
        %v1430 = vpack.c.b16 %v1417, %v1416
        %v1431 = vpack.c.b16 %v1419, %v1418
        %v1432 = vpack.c.b16 %v1421, %v1420
        %v1433 = vpack.c.b16 %v1423, %v1422
        %v1434 = vpack.c.b16 %v1425, %v1424
        %v1435 = vpack.c.b16 %v1427, %v1426
        %1444 = vmatpush.bf16.msra.mxu0 %v1435
        %1445 = vmatpush.bf16.msra.mxu0 %v1434
        %1446 = vmatpush.bf16.msra.mxu0 %v1433
        %1447 = vmatpush.bf16.msra.mxu0 %v1432
        %1448 = vmatpush.bf16.msra.mxu0 %v1431
        %1449 = vmatpush.bf16.msra.mxu0 %v1430
        %1450 = vmatpush.bf16.msra.mxu0 %v1429
        %1451 = vmatpush.bf16.msra.mxu0 %v1428
        %1452 = vmatmul.bf16.gmra.mxu0 %v1295
        %v1453 = vpop.f32.mrf.mxu0
        %v1454 = vadd.f32 0.0, %v1453
        %v1455 = vpop.f32.mrf.mxu0
        %v1456 = vadd.f32 0.0, %v1455
        %1457 = vmatmul.bf16.gmra.mxu0 %v1303
        %v1458 = vpop.f32.mrf.mxu0
        %v1459 = vadd.f32 0.0, %v1458
        %v1460 = vpop.f32.mrf.mxu0
        %v1461 = vadd.f32 0.0, %v1460
        %1462 = vmatmul.bf16.gmra.mxu0 %v1311
        %v1463 = vpop.f32.mrf.mxu0
        %v1464 = vadd.f32 0.0, %v1463
        %v1465 = vpop.f32.mrf.mxu0
        %v1466 = vadd.f32 0.0, %v1465
        %1467 = vmatmul.bf16.gmra.mxu0 %v1319
        %v1468 = vpop.f32.mrf.mxu0
        %v1469 = vadd.f32 0.0, %v1468
        %v1470 = vpop.f32.mrf.mxu0
        %v1471 = vadd.f32 0.0, %v1470
        %1472 = vmatmul.bf16.gmra.mxu0 %v1327
        %v1473 = vpop.f32.mrf.mxu0
        %v1474 = vadd.f32 0.0, %v1473
        %v1475 = vpop.f32.mrf.mxu0
        %v1476 = vadd.f32 0.0, %v1475
        %1477 = vmatmul.bf16.gmra.mxu0 %v1335
        %v1478 = vpop.f32.mrf.mxu0
        %v1479 = vadd.f32 0.0, %v1478
        %v1480 = vpop.f32.mrf.mxu0
        %v1481 = vadd.f32 0.0, %v1480
        %1482 = vmatmul.bf16.gmra.mxu0 %v1343
        %v1483 = vpop.f32.mrf.mxu0
        %v1484 = vadd.f32 0.0, %v1483
        %v1485 = vpop.f32.mrf.mxu0
        %v1486 = vadd.f32 0.0, %v1485
        %1487 = vmatmul.bf16.gmra.mxu0 %v1351
        %v1488 = vpop.f32.mrf.mxu0
        %v1489 = vadd.f32 0.0, %v1488
        %v1490 = vpop.f32.mrf.mxu0
        %v1491 = vadd.f32 0.0, %v1490
        %1492 = vmatmul.bf16.gmra.mxu0 %v1359
        %v1493 = vpop.f32.mrf.mxu0
        %v1494 = vadd.f32 0.0, %v1493
        %v1495 = vpop.f32.mrf.mxu0
        %v1496 = vadd.f32 0.0, %v1495
        %1497 = vmatmul.bf16.gmra.mxu0 %v1367
        %v1498 = vpop.f32.mrf.mxu0
        %v1499 = vadd.f32 0.0, %v1498
        %v1500 = vpop.f32.mrf.mxu0
        %v1501 = vadd.f32 0.0, %v1500
        %1502 = vmatmul.bf16.gmra.mxu0 %v1375
        %v1503 = vpop.f32.mrf.mxu0
        %v1504 = vadd.f32 0.0, %v1503
        %v1505 = vpop.f32.mrf.mxu0
        %v1506 = vadd.f32 0.0, %v1505
        %1507 = vmatmul.bf16.gmra.mxu0 %v1383
        %v1508 = vpop.f32.mrf.mxu0
        %v1509 = vadd.f32 0.0, %v1508
        %v1510 = vpop.f32.mrf.mxu0
        %v1511 = vadd.f32 0.0, %v1510
        %1512 = vdwg.mxu0
        %v1513 = vadd.f32 %v1240, %v1454
        %v1514 = vadd.f32 %v1241, %v1456
        %v1515 = vadd.f32 %v1242, %v1459
        %v1516 = vadd.f32 %v1243, %v1461
        %v1517 = vadd.f32 %v1244, %v1464
        %v1518 = vadd.f32 %v1245, %v1466
        %v1519 = vadd.f32 %v1246, %v1469
        %v1520 = vadd.f32 %v1247, %v1471
        %v1521 = vadd.f32 %v1248, %v1474
        %v1522 = vadd.f32 %v1249, %v1476
        %v1523 = vadd.f32 %v1250, %v1479
        %v1524 = vadd.f32 %v1251, %v1481
        %v1525 = vadd.f32 %v1252, %v1484
        %v1526 = vadd.f32 %v1253, %v1486
        %v1527 = vadd.f32 %v1254, %v1489
        %v1528 = vadd.f32 %v1255, %v1491
        %v1529 = vadd.f32 %v1256, %v1494
        %v1530 = vadd.f32 %v1257, %v1496
        %v1531 = vadd.f32 %v1258, %v1499
        %v1532 = vadd.f32 %v1259, %v1501
        %v1533 = vadd.f32 %v1260, %v1504
        %v1534 = vadd.f32 %v1261, %v1506
        %v1535 = vadd.f32 %v1262, %v1509
        %v1536 = vadd.f32 %v1263, %v1511
        %s1537 = scalar_lea.vmem [#allocation7], 320
        %v1538 = vld [vmem:[%s1537] sm:$0xf]
        %v1539 = vld [vmem:[%s1537 + $0x4] sm:$0xf]
        %v1540 = vld [vmem:[%s1537 + $0x8] sm:$0xf]
        %v1541 = vld [vmem:[%s1537 + $0xc] sm:$0xf]
        %v1542 = vld [vmem:[%s1537 + $0x10] sm:$0xf]
        %v1543 = vld [vmem:[%s1537 + $0x14] sm:$0xf]
        %v1544 = vld [vmem:[%s1537 + $0x18] sm:$0xf]
        %v1545 = vld [vmem:[%s1537 + $0x1c] sm:$0xf]
        %v1546 = vld [vmem:[%s1537 + $0x20] sm:$0xf]
        %v1547 = vld [vmem:[%s1537 + $0x24] sm:$0xf]
        %v1548 = vld [vmem:[%s1537 + $0x28] sm:$0xf]
        %v1549 = vld [vmem:[%s1537 + $0x2c] sm:$0xf]
        %v1550 = vld [vmem:[%s1537 + $0x30] sm:$0xf]
        %v1551 = vld [vmem:[%s1537 + $0x34] sm:$0xf]
        %v1552 = vld [vmem:[%s1537 + $0x38] sm:$0xf]
        %v1553 = vld [vmem:[%s1537 + $0x3c] sm:$0xf]
        %v1554 = vrot.slane %v1099, 1
        %v1555 = vrot.slane %v1100, 1
        %v1556 = vsel %vm899, %v1554, %v1555
        %v1557 = vrot.slane %v1101, 1
        %v1558 = vsel %vm899, %v1555, %v1557
        %v1559 = vrot.slane %v1102, 1
        %v1560 = vsel %vm899, %v1557, %v1559
        %v1561 = vrot.slane %v1103, 1
        %v1562 = vsel %vm899, %v1559, %v1561
        %v1563 = vrot.slane %v1104, 1
        %v1564 = vsel %vm899, %v1561, %v1563
        %v1565 = vrot.slane %v1105, 1
        %v1566 = vsel %vm899, %v1563, %v1565
        %v1567 = vrot.slane %v1106, 1
        %v1568 = vsel %vm899, %v1565, %v1567
        %v1569 = vrot.slane %v1107, 1
        %v1570 = vsel %vm899, %v1567, %v1569
        %v1571 = vrot.slane %v1108, 1
        %v1572 = vsel %vm899, %v1569, %v1571
        %v1573 = vrot.slane %v1109, 1
        %v1574 = vsel %vm899, %v1571, %v1573
        %v1575 = vrot.slane %v1110, 1
        %v1576 = vsel %vm899, %v1573, %v1575
        %v1577 = vrot.slane %v1283, 1
        %v1578 = vsel %vm899, %v1575, %v1577
        %v1607 = vunpack.c.l.b16 %v1538
        %v1608 = vunpack.c.l.b16 %v1539
        %v1609 = vunpack.c.l.b16 %v1540
        %v1610 = vunpack.c.l.b16 %v1541
        %v1611 = vunpack.c.l.b16 %v1542
        %v1612 = vunpack.c.l.b16 %v1543
        %v1613 = vunpack.c.l.b16 %v1544
        %v1614 = vunpack.c.l.b16 %v1545
        %v1615 = vunpack.c.l.b16 %v1546
        %v1616 = vunpack.c.l.b16 %v1547
        %v1617 = vunpack.c.l.b16 %v1548
        %v1618 = vunpack.c.l.b16 %v1549
        %v1619 = vunpack.c.l.b16 %v1550
        %v1620 = vunpack.c.l.b16 %v1551
        %v1621 = vunpack.c.l.b16 %v1552
        %v1622 = vunpack.c.l.b16 %v1553
        %v1623 = vpack.c.b16 %v1608, %v1607
        %v1624 = vpack.c.b16 %v1610, %v1609
        %v1625 = vpack.c.b16 %v1612, %v1611
        %v1626 = vpack.c.b16 %v1614, %v1613
        %v1627 = vpack.c.b16 %v1616, %v1615
        %v1628 = vpack.c.b16 %v1618, %v1617
        %v1629 = vpack.c.b16 %v1620, %v1619
        %v1630 = vpack.c.b16 %v1622, %v1621
        %1639 = vmatpush.bf16.msra.mxu0 %v1630
        %1640 = vmatpush.bf16.msra.mxu0 %v1629
        %1641 = vmatpush.bf16.msra.mxu0 %v1628
        %1642 = vmatpush.bf16.msra.mxu0 %v1627
        %1643 = vmatpush.bf16.msra.mxu0 %v1626
        %1644 = vmatpush.bf16.msra.mxu0 %v1625
        %1645 = vmatpush.bf16.msra.mxu0 %v1624
        %1646 = vmatpush.bf16.msra.mxu0 %v1623
        %1647 = vmatmul.bf16.gmra.mxu0 %v1556
        %v1648 = vpop.f32.mrf.mxu0
        %v1649 = vadd.f32 0.0, %v1648
        %v1650 = vpop.f32.mrf.mxu0
        %v1651 = vadd.f32 0.0, %v1650
        %1652 = vmatmul.bf16.gmra.mxu0 %v1558
        %v1653 = vpop.f32.mrf.mxu0
        %v1654 = vadd.f32 0.0, %v1653
        %v1655 = vpop.f32.mrf.mxu0
        %v1656 = vadd.f32 0.0, %v1655
        %1657 = vmatmul.bf16.gmra.mxu0 %v1560
        %v1658 = vpop.f32.mrf.mxu0
        %v1659 = vadd.f32 0.0, %v1658
        %v1660 = vpop.f32.mrf.mxu0
        %v1661 = vadd.f32 0.0, %v1660
        %1662 = vmatmul.bf16.gmra.mxu0 %v1562
        %v1663 = vpop.f32.mrf.mxu0
        %v1664 = vadd.f32 0.0, %v1663
        %v1665 = vpop.f32.mrf.mxu0
        %v1666 = vadd.f32 0.0, %v1665
        %1667 = vmatmul.bf16.gmra.mxu0 %v1564
        %v1668 = vpop.f32.mrf.mxu0
        %v1669 = vadd.f32 0.0, %v1668
        %v1670 = vpop.f32.mrf.mxu0
        %v1671 = vadd.f32 0.0, %v1670
        %1672 = vmatmul.bf16.gmra.mxu0 %v1566
        %v1673 = vpop.f32.mrf.mxu0
        %v1674 = vadd.f32 0.0, %v1673
        %v1675 = vpop.f32.mrf.mxu0
        %v1676 = vadd.f32 0.0, %v1675
        %1677 = vmatmul.bf16.gmra.mxu0 %v1568
        %v1678 = vpop.f32.mrf.mxu0
        %v1679 = vadd.f32 0.0, %v1678
        %v1680 = vpop.f32.mrf.mxu0
        %v1681 = vadd.f32 0.0, %v1680
        %1682 = vmatmul.bf16.gmra.mxu0 %v1570
        %v1683 = vpop.f32.mrf.mxu0
        %v1684 = vadd.f32 0.0, %v1683
        %v1685 = vpop.f32.mrf.mxu0
        %v1686 = vadd.f32 0.0, %v1685
        %1687 = vmatmul.bf16.gmra.mxu0 %v1572
        %v1688 = vpop.f32.mrf.mxu0
        %v1689 = vadd.f32 0.0, %v1688
        %v1690 = vpop.f32.mrf.mxu0
        %v1691 = vadd.f32 0.0, %v1690
        %1692 = vmatmul.bf16.gmra.mxu0 %v1574
        %v1693 = vpop.f32.mrf.mxu0
        %v1694 = vadd.f32 0.0, %v1693
        %v1695 = vpop.f32.mrf.mxu0
        %v1696 = vadd.f32 0.0, %v1695
        %1697 = vmatmul.bf16.gmra.mxu0 %v1576
        %v1698 = vpop.f32.mrf.mxu0
        %v1699 = vadd.f32 0.0, %v1698
        %v1700 = vpop.f32.mrf.mxu0
        %v1701 = vadd.f32 0.0, %v1700
        %1702 = vmatmul.bf16.gmra.mxu0 %v1578
        %v1703 = vpop.f32.mrf.mxu0
        %v1704 = vadd.f32 0.0, %v1703
        %v1705 = vpop.f32.mrf.mxu0
        %v1706 = vadd.f32 0.0, %v1705
        %1707 = vdwg.mxu0
        %v1708 = vadd.f32 %v1513, %v1649
        %v1709 = vadd.f32 %v1514, %v1651
        %v1710 = vadd.f32 %v1515, %v1654
        %v1711 = vadd.f32 %v1516, %v1656
        %v1712 = vadd.f32 %v1517, %v1659
        %v1713 = vadd.f32 %v1518, %v1661
        %v1714 = vadd.f32 %v1519, %v1664
        %v1715 = vadd.f32 %v1520, %v1666
        %v1716 = vadd.f32 %v1521, %v1669
        %v1717 = vadd.f32 %v1522, %v1671
        %v1718 = vadd.f32 %v1523, %v1674
        %v1719 = vadd.f32 %v1524, %v1676
        %v1720 = vadd.f32 %v1525, %v1679
        %v1721 = vadd.f32 %v1526, %v1681
        %v1722 = vadd.f32 %v1527, %v1684
        %v1723 = vadd.f32 %v1528, %v1686
        %v1724 = vadd.f32 %v1529, %v1689
        %v1725 = vadd.f32 %v1530, %v1691
        %v1726 = vadd.f32 %v1531, %v1694
        %v1727 = vadd.f32 %v1532, %v1696
        %v1728 = vadd.f32 %v1533, %v1699
        %v1729 = vadd.f32 %v1534, %v1701
        %v1730 = vadd.f32 %v1535, %v1704
        %v1731 = vadd.f32 %v1536, %v1706
        %s1732 = scalar_lea.vmem [#allocation7], 384
        %v1733 = vld [vmem:[%s1732] sm:$0xf]
        %v1734 = vld [vmem:[%s1732 + $0x4] sm:$0xf]
        %v1735 = vld [vmem:[%s1732 + $0x8] sm:$0xf]
        %v1736 = vld [vmem:[%s1732 + $0xc] sm:$0xf]
        %v1737 = vld [vmem:[%s1732 + $0x10] sm:$0xf]
        %v1738 = vld [vmem:[%s1732 + $0x14] sm:$0xf]
        %v1739 = vld [vmem:[%s1732 + $0x18] sm:$0xf]
        %v1740 = vld [vmem:[%s1732 + $0x1c] sm:$0xf]
        %v1741 = vld [vmem:[%s1732 + $0x20] sm:$0xf]
        %v1742 = vld [vmem:[%s1732 + $0x24] sm:$0xf]
        %v1743 = vld [vmem:[%s1732 + $0x28] sm:$0xf]
        %v1744 = vld [vmem:[%s1732 + $0x2c] sm:$0xf]
        %v1745 = vld [vmem:[%s1732 + $0x30] sm:$0xf]
        %v1746 = vld [vmem:[%s1732 + $0x34] sm:$0xf]
        %v1747 = vld [vmem:[%s1732 + $0x38] sm:$0xf]
        %v1748 = vld [vmem:[%s1732 + $0x3c] sm:$0xf]
        %v1751 = vunpack.c.l.b16 %v425
        %v1752 = vunpack.c.l.b16 %v426
        %v1753 = vpack.c.b16 %v1097, %v509
        %v1754 = vpack.c.b16 %v1282, %v1098
        %v1755 = vpack.c.b16 %v1752, %v1751
        %v1775 = vunpack.c.l.b16 %v1733
        %v1776 = vunpack.c.l.b16 %v1734
        %v1777 = vunpack.c.l.b16 %v1735
        %v1778 = vunpack.c.l.b16 %v1736
        %v1779 = vunpack.c.l.b16 %v1737
        %v1780 = vunpack.c.l.b16 %v1738
        %v1781 = vunpack.c.l.b16 %v1739
        %v1782 = vunpack.c.l.b16 %v1740
        %v1783 = vunpack.c.l.b16 %v1741
        %v1784 = vunpack.c.l.b16 %v1742
        %v1785 = vunpack.c.l.b16 %v1743
        %v1786 = vunpack.c.l.b16 %v1744
        %v1787 = vunpack.c.l.b16 %v1745
        %v1788 = vunpack.c.l.b16 %v1746
        %v1789 = vunpack.c.l.b16 %v1747
        %v1790 = vunpack.c.l.b16 %v1748
        %v1791 = vpack.c.b16 %v1776, %v1775
        %v1792 = vpack.c.b16 %v1778, %v1777
        %v1793 = vpack.c.b16 %v1780, %v1779
        %v1794 = vpack.c.b16 %v1782, %v1781
        %v1795 = vpack.c.b16 %v1784, %v1783
        %v1796 = vpack.c.b16 %v1786, %v1785
        %v1797 = vpack.c.b16 %v1788, %v1787
        %v1798 = vpack.c.b16 %v1790, %v1789
        %1807 = vmatpush.bf16.msra.mxu0 %v1798
        %1808 = vmatpush.bf16.msra.mxu0 %v1797
        %1809 = vmatpush.bf16.msra.mxu0 %v1796
        %1810 = vmatpush.bf16.msra.mxu0 %v1795
        %1811 = vmatpush.bf16.msra.mxu0 %v1794
        %1812 = vmatpush.bf16.msra.mxu0 %v1793
        %1813 = vmatpush.bf16.msra.mxu0 %v1792
        %1814 = vmatpush.bf16.msra.mxu0 %v1791
        %1815 = vmatmul.bf16.gmra.mxu0 %v513
        %v1816 = vpop.f32.mrf.mxu0
        %v1817 = vadd.f32 0.0, %v1816
        %v1818 = vpop.f32.mrf.mxu0
        %v1819 = vadd.f32 0.0, %v1818
        %1820 = vmatmul.bf16.gmra.mxu0 %v514
        %v1821 = vpop.f32.mrf.mxu0
        %v1822 = vadd.f32 0.0, %v1821
        %v1823 = vpop.f32.mrf.mxu0
        %v1824 = vadd.f32 0.0, %v1823
        %1825 = vmatmul.bf16.gmra.mxu0 %v515
        %v1826 = vpop.f32.mrf.mxu0
        %v1827 = vadd.f32 0.0, %v1826
        %v1828 = vpop.f32.mrf.mxu0
        %v1829 = vadd.f32 0.0, %v1828
        %1830 = vmatmul.bf16.gmra.mxu0 %v516
        %v1831 = vpop.f32.mrf.mxu0
        %v1832 = vadd.f32 0.0, %v1831
        %v1833 = vpop.f32.mrf.mxu0
        %v1834 = vadd.f32 0.0, %v1833
        %1835 = vmatmul.bf16.gmra.mxu0 %v517
        %v1836 = vpop.f32.mrf.mxu0
        %v1837 = vadd.f32 0.0, %v1836
        %v1838 = vpop.f32.mrf.mxu0
        %v1839 = vadd.f32 0.0, %v1838
        %1840 = vmatmul.bf16.gmra.mxu0 %v518
        %v1841 = vpop.f32.mrf.mxu0
        %v1842 = vadd.f32 0.0, %v1841
        %v1843 = vpop.f32.mrf.mxu0
        %v1844 = vadd.f32 0.0, %v1843
        %1845 = vmatmul.bf16.gmra.mxu0 %v519
        %v1846 = vpop.f32.mrf.mxu0
        %v1847 = vadd.f32 0.0, %v1846
        %v1848 = vpop.f32.mrf.mxu0
        %v1849 = vadd.f32 0.0, %v1848
        %1850 = vmatmul.bf16.gmra.mxu0 %v520
        %v1851 = vpop.f32.mrf.mxu0
        %v1852 = vadd.f32 0.0, %v1851
        %v1853 = vpop.f32.mrf.mxu0
        %v1854 = vadd.f32 0.0, %v1853
        %1855 = vmatmul.bf16.gmra.mxu0 %v521
        %v1856 = vpop.f32.mrf.mxu0
        %v1857 = vadd.f32 0.0, %v1856
        %v1858 = vpop.f32.mrf.mxu0
        %v1859 = vadd.f32 0.0, %v1858
        %1860 = vmatmul.bf16.gmra.mxu0 %v1753
        %v1861 = vpop.f32.mrf.mxu0
        %v1862 = vadd.f32 0.0, %v1861
        %v1863 = vpop.f32.mrf.mxu0
        %v1864 = vadd.f32 0.0, %v1863
        %1865 = vmatmul.bf16.gmra.mxu0 %v1754
        %v1866 = vpop.f32.mrf.mxu0
        %v1867 = vadd.f32 0.0, %v1866
        %v1868 = vpop.f32.mrf.mxu0
        %v1869 = vadd.f32 0.0, %v1868
        %1870 = vmatmul.bf16.gmra.mxu0 %v1755
        %v1871 = vpop.f32.mrf.mxu0
        %v1872 = vadd.f32 0.0, %v1871
        %v1873 = vpop.f32.mrf.mxu0
        %v1874 = vadd.f32 0.0, %v1873
        %1875 = vdwg.mxu0
        %v1876 = vadd.f32 %v1708, %v1817
        %v1877 = vadd.f32 %v1709, %v1819
        %v1878 = vadd.f32 %v1710, %v1822
        %v1879 = vadd.f32 %v1711, %v1824
        %v1880 = vadd.f32 %v1712, %v1827
        %v1881 = vadd.f32 %v1713, %v1829
        %v1882 = vadd.f32 %v1714, %v1832
        %v1883 = vadd.f32 %v1715, %v1834
        %v1884 = vadd.f32 %v1716, %v1837
        %v1885 = vadd.f32 %v1717, %v1839
        %v1886 = vadd.f32 %v1718, %v1842
        %v1887 = vadd.f32 %v1719, %v1844
        %v1888 = vadd.f32 %v1720, %v1847
        %v1889 = vadd.f32 %v1721, %v1849
        %v1890 = vadd.f32 %v1722, %v1852
        %v1891 = vadd.f32 %v1723, %v1854
        %v1892 = vadd.f32 %v1724, %v1857
        %v1893 = vadd.f32 %v1725, %v1859
        %v1894 = vadd.f32 %v1726, %v1862
        %v1895 = vadd.f32 %v1727, %v1864
        %v1896 = vadd.f32 %v1728, %v1867
        %v1897 = vadd.f32 %v1729, %v1869
        %v1898 = vadd.f32 %v1730, %v1872
        %v1899 = vadd.f32 %v1731, %v1874
        %s1900 = scalar_lea.vmem [#allocation7], 448
        %v1901 = vld [vmem:[%s1900] sm:$0xf]
        %v1902 = vld [vmem:[%s1900 + $0x4] sm:$0xf]
        %v1903 = vld [vmem:[%s1900 + $0x8] sm:$0xf]
        %v1904 = vld [vmem:[%s1900 + $0xc] sm:$0xf]
        %v1905 = vld [vmem:[%s1900 + $0x10] sm:$0xf]
        %v1906 = vld [vmem:[%s1900 + $0x14] sm:$0xf]
        %v1907 = vld [vmem:[%s1900 + $0x18] sm:$0xf]
        %v1908 = vld [vmem:[%s1900 + $0x1c] sm:$0xf]
        %v1909 = vld [vmem:[%s1900 + $0x20] sm:$0xf]
        %v1910 = vld [vmem:[%s1900 + $0x24] sm:$0xf]
        %v1911 = vld [vmem:[%s1900 + $0x28] sm:$0xf]
        %v1912 = vld [vmem:[%s1900 + $0x2c] sm:$0xf]
        %v1913 = vld [vmem:[%s1900 + $0x30] sm:$0xf]
        %v1914 = vld [vmem:[%s1900 + $0x34] sm:$0xf]
        %v1915 = vld [vmem:[%s1900 + $0x38] sm:$0xf]
        %v1916 = vld [vmem:[%s1900 + $0x3c] sm:$0xf]
        %v1918 = vunpack.c.l.b16 0
        %v1919 = vpack.c.b16 %v1918, %v1918
        %v1921 = vshll.u32 %v1753, 16
        %v1923 = vrot.slane %v1921, 1
        %v1924 = vsel %vm523, %v618, %v1923
        %v1925 = vshrl.u32 %v1753, 16
        %v1927 = vor.u32 %v1925, %v1923
        %v1929 = vshll.u32 %v1754, 16
        %v1931 = vrot.slane %v1929, 1
        %v1932 = vsel %vm523, %v1927, %v1931
        %v1933 = vshrl.u32 %v1754, 16
        %v1935 = vor.u32 %v1933, %v1931
        %v1937 = vshll.u32 %v1755, 16
        %v1939 = vrot.slane %v1937, 1
        %v1940 = vsel %vm523, %v1935, %v1939
        %v1941 = vshrl.u32 %v1755, 16
        %v1943 = vor.u32 %v1941, %v1939
        %v1945 = vshll.u32 %v1919, 16
        %v1947 = vrot.slane %v1945, 1
        %v1948 = vsel %vm523, %v1943, %v1947
        %v1969 = vunpack.c.l.b16 %v1901
        %v1970 = vunpack.c.l.b16 %v1902
        %v1971 = vunpack.c.l.b16 %v1903
        %v1972 = vunpack.c.l.b16 %v1904
        %v1973 = vunpack.c.l.b16 %v1905
        %v1974 = vunpack.c.l.b16 %v1906
        %v1975 = vunpack.c.l.b16 %v1907
        %v1976 = vunpack.c.l.b16 %v1908
        %v1977 = vunpack.c.l.b16 %v1909
        %v1978 = vunpack.c.l.b16 %v1910
        %v1979 = vunpack.c.l.b16 %v1911
        %v1980 = vunpack.c.l.b16 %v1912
        %v1981 = vunpack.c.l.b16 %v1913
        %v1982 = vunpack.c.l.b16 %v1914
        %v1983 = vunpack.c.l.b16 %v1915
        %v1984 = vunpack.c.l.b16 %v1916
        %v1985 = vpack.c.b16 %v1970, %v1969
        %v1986 = vpack.c.b16 %v1972, %v1971
        %v1987 = vpack.c.b16 %v1974, %v1973
        %v1988 = vpack.c.b16 %v1976, %v1975
        %v1989 = vpack.c.b16 %v1978, %v1977
        %v1990 = vpack.c.b16 %v1980, %v1979
        %v1991 = vpack.c.b16 %v1982, %v1981
        %v1992 = vpack.c.b16 %v1984, %v1983
        %2001 = vmatpush.bf16.msra.mxu0 %v1992
        %2002 = vmatpush.bf16.msra.mxu0 %v1991
        %2003 = vmatpush.bf16.msra.mxu0 %v1990
        %2004 = vmatpush.bf16.msra.mxu0 %v1989
        %2005 = vmatpush.bf16.msra.mxu0 %v1988
        %2006 = vmatpush.bf16.msra.mxu0 %v1987
        %2007 = vmatpush.bf16.msra.mxu0 %v1986
        %2008 = vmatpush.bf16.msra.mxu0 %v1985
        %2009 = vmatmul.bf16.gmra.mxu0 %v559
        %v2010 = vpop.f32.mrf.mxu0
        %v2011 = vadd.f32 0.0, %v2010
        %v2012 = vpop.f32.mrf.mxu0
        %v2013 = vadd.f32 0.0, %v2012
        %2014 = vmatmul.bf16.gmra.mxu0 %v567
        %v2015 = vpop.f32.mrf.mxu0
        %v2016 = vadd.f32 0.0, %v2015
        %v2017 = vpop.f32.mrf.mxu0
        %v2018 = vadd.f32 0.0, %v2017
        %2019 = vmatmul.bf16.gmra.mxu0 %v575
        %v2020 = vpop.f32.mrf.mxu0
        %v2021 = vadd.f32 0.0, %v2020
        %v2022 = vpop.f32.mrf.mxu0
        %v2023 = vadd.f32 0.0, %v2022
        %2024 = vmatmul.bf16.gmra.mxu0 %v583
        %v2025 = vpop.f32.mrf.mxu0
        %v2026 = vadd.f32 0.0, %v2025
        %v2027 = vpop.f32.mrf.mxu0
        %v2028 = vadd.f32 0.0, %v2027
        %2029 = vmatmul.bf16.gmra.mxu0 %v591
        %v2030 = vpop.f32.mrf.mxu0
        %v2031 = vadd.f32 0.0, %v2030
        %v2032 = vpop.f32.mrf.mxu0
        %v2033 = vadd.f32 0.0, %v2032
        %2034 = vmatmul.bf16.gmra.mxu0 %v599
        %v2035 = vpop.f32.mrf.mxu0
        %v2036 = vadd.f32 0.0, %v2035
        %v2037 = vpop.f32.mrf.mxu0
        %v2038 = vadd.f32 0.0, %v2037
        %2039 = vmatmul.bf16.gmra.mxu0 %v607
        %v2040 = vpop.f32.mrf.mxu0
        %v2041 = vadd.f32 0.0, %v2040
        %v2042 = vpop.f32.mrf.mxu0
        %v2043 = vadd.f32 0.0, %v2042
        %2044 = vmatmul.bf16.gmra.mxu0 %v615
        %v2045 = vpop.f32.mrf.mxu0
        %v2046 = vadd.f32 0.0, %v2045
        %v2047 = vpop.f32.mrf.mxu0
        %v2048 = vadd.f32 0.0, %v2047
        %2049 = vmatmul.bf16.gmra.mxu0 %v1924
        %v2050 = vpop.f32.mrf.mxu0
        %v2051 = vadd.f32 0.0, %v2050
        %v2052 = vpop.f32.mrf.mxu0
        %v2053 = vadd.f32 0.0, %v2052
        %2054 = vmatmul.bf16.gmra.mxu0 %v1932
        %v2055 = vpop.f32.mrf.mxu0
        %v2056 = vadd.f32 0.0, %v2055
        %v2057 = vpop.f32.mrf.mxu0
        %v2058 = vadd.f32 0.0, %v2057
        %2059 = vmatmul.bf16.gmra.mxu0 %v1940
        %v2060 = vpop.f32.mrf.mxu0
        %v2061 = vadd.f32 0.0, %v2060
        %v2062 = vpop.f32.mrf.mxu0
        %v2063 = vadd.f32 0.0, %v2062
        %2064 = vmatmul.bf16.gmra.mxu0 %v1948
        %v2065 = vpop.f32.mrf.mxu0
        %v2066 = vadd.f32 0.0, %v2065
        %v2067 = vpop.f32.mrf.mxu0
        %v2068 = vadd.f32 0.0, %v2067
        %2069 = vdwg.mxu0
        %v2070 = vadd.f32 %v1876, %v2011
        %v2071 = vadd.f32 %v1877, %v2013
        %v2072 = vadd.f32 %v1878, %v2016
        %v2073 = vadd.f32 %v1879, %v2018
        %v2074 = vadd.f32 %v1880, %v2021
        %v2075 = vadd.f32 %v1881, %v2023
        %v2076 = vadd.f32 %v1882, %v2026
        %v2077 = vadd.f32 %v1883, %v2028
        %v2078 = vadd.f32 %v1884, %v2031
        %v2079 = vadd.f32 %v1885, %v2033
        %v2080 = vadd.f32 %v1886, %v2036
        %v2081 = vadd.f32 %v1887, %v2038
        %v2082 = vadd.f32 %v1888, %v2041
        %v2083 = vadd.f32 %v1889, %v2043
        %v2084 = vadd.f32 %v1890, %v2046
        %v2085 = vadd.f32 %v1891, %v2048
        %v2086 = vadd.f32 %v1892, %v2051
        %v2087 = vadd.f32 %v1893, %v2053
        %v2088 = vadd.f32 %v1894, %v2056
        %v2089 = vadd.f32 %v1895, %v2058
        %v2090 = vadd.f32 %v1896, %v2061
        %v2091 = vadd.f32 %v1897, %v2063
        %v2092 = vadd.f32 %v1898, %v2066
        %v2093 = vadd.f32 %v1899, %v2068
        %s2094 = scalar_lea.vmem [#allocation7], 512
        %v2095 = vld [vmem:[%s2094] sm:$0xf]
        %v2096 = vld [vmem:[%s2094 + $0x4] sm:$0xf]
        %v2097 = vld [vmem:[%s2094 + $0x8] sm:$0xf]
        %v2098 = vld [vmem:[%s2094 + $0xc] sm:$0xf]
        %v2099 = vld [vmem:[%s2094 + $0x10] sm:$0xf]
        %v2100 = vld [vmem:[%s2094 + $0x14] sm:$0xf]
        %v2101 = vld [vmem:[%s2094 + $0x18] sm:$0xf]
        %v2102 = vld [vmem:[%s2094 + $0x1c] sm:$0xf]
        %v2103 = vld [vmem:[%s2094 + $0x20] sm:$0xf]
        %v2104 = vld [vmem:[%s2094 + $0x24] sm:$0xf]
        %v2105 = vld [vmem:[%s2094 + $0x28] sm:$0xf]
        %v2106 = vld [vmem:[%s2094 + $0x2c] sm:$0xf]
        %v2107 = vld [vmem:[%s2094 + $0x30] sm:$0xf]
        %v2108 = vld [vmem:[%s2094 + $0x34] sm:$0xf]
        %v2109 = vld [vmem:[%s2094 + $0x38] sm:$0xf]
        %v2110 = vld [vmem:[%s2094 + $0x3c] sm:$0xf]
        %v2111 = vrot.slane %v1753, 1
        %v2112 = vsel %vm899, %v921, %v2111
        %v2113 = vrot.slane %v1754, 1
        %v2114 = vsel %vm899, %v2111, %v2113
        %v2115 = vrot.slane %v1755, 1
        %v2116 = vsel %vm899, %v2113, %v2115
        %v2117 = vrot.slane %v1919, 1
        %v2118 = vsel %vm899, %v2115, %v2117
        %v2139 = vunpack.c.l.b16 %v2095
        %v2140 = vunpack.c.l.b16 %v2096
        %v2141 = vunpack.c.l.b16 %v2097
        %v2142 = vunpack.c.l.b16 %v2098
        %v2143 = vunpack.c.l.b16 %v2099
        %v2144 = vunpack.c.l.b16 %v2100
        %v2145 = vunpack.c.l.b16 %v2101
        %v2146 = vunpack.c.l.b16 %v2102
        %v2147 = vunpack.c.l.b16 %v2103
        %v2148 = vunpack.c.l.b16 %v2104
        %v2149 = vunpack.c.l.b16 %v2105
        %v2150 = vunpack.c.l.b16 %v2106
        %v2151 = vunpack.c.l.b16 %v2107
        %v2152 = vunpack.c.l.b16 %v2108
        %v2153 = vunpack.c.l.b16 %v2109
        %v2154 = vunpack.c.l.b16 %v2110
        %v2155 = vpack.c.b16 %v2140, %v2139
        %v2156 = vpack.c.b16 %v2142, %v2141
        %v2157 = vpack.c.b16 %v2144, %v2143
        %v2158 = vpack.c.b16 %v2146, %v2145
        %v2159 = vpack.c.b16 %v2148, %v2147
        %v2160 = vpack.c.b16 %v2150, %v2149
        %v2161 = vpack.c.b16 %v2152, %v2151
        %v2162 = vpack.c.b16 %v2154, %v2153
        %2171 = vmatpush.bf16.msra.mxu0 %v2162
        %2172 = vmatpush.bf16.msra.mxu0 %v2161
        %2173 = vmatpush.bf16.msra.mxu0 %v2160
        %2174 = vmatpush.bf16.msra.mxu0 %v2159
        %2175 = vmatpush.bf16.msra.mxu0 %v2158
        %2176 = vmatpush.bf16.msra.mxu0 %v2157
        %2177 = vmatpush.bf16.msra.mxu0 %v2156
        %2178 = vmatpush.bf16.msra.mxu0 %v2155
        %2179 = vmatmul.bf16.gmra.mxu0 %v908
        %v2180 = vpop.f32.mrf.mxu0
        %v2181 = vadd.f32 0.0, %v2180
        %v2182 = vpop.f32.mrf.mxu0
        %v2183 = vadd.f32 0.0, %v2182
        %2184 = vmatmul.bf16.gmra.mxu0 %v910
        %v2185 = vpop.f32.mrf.mxu0
        %v2186 = vadd.f32 0.0, %v2185
        %v2187 = vpop.f32.mrf.mxu0
        %v2188 = vadd.f32 0.0, %v2187
        %2189 = vmatmul.bf16.gmra.mxu0 %v912
        %v2190 = vpop.f32.mrf.mxu0
        %v2191 = vadd.f32 0.0, %v2190
        %v2192 = vpop.f32.mrf.mxu0
        %v2193 = vadd.f32 0.0, %v2192
        %2194 = vmatmul.bf16.gmra.mxu0 %v914
        %v2195 = vpop.f32.mrf.mxu0
        %v2196 = vadd.f32 0.0, %v2195
        %v2197 = vpop.f32.mrf.mxu0
        %v2198 = vadd.f32 0.0, %v2197
        %2199 = vmatmul.bf16.gmra.mxu0 %v916
        %v2200 = vpop.f32.mrf.mxu0
        %v2201 = vadd.f32 0.0, %v2200
        %v2202 = vpop.f32.mrf.mxu0
        %v2203 = vadd.f32 0.0, %v2202
        %2204 = vmatmul.bf16.gmra.mxu0 %v918
        %v2205 = vpop.f32.mrf.mxu0
        %v2206 = vadd.f32 0.0, %v2205
        %v2207 = vpop.f32.mrf.mxu0
        %v2208 = vadd.f32 0.0, %v2207
        %2209 = vmatmul.bf16.gmra.mxu0 %v920
        %v2210 = vpop.f32.mrf.mxu0
        %v2211 = vadd.f32 0.0, %v2210
        %v2212 = vpop.f32.mrf.mxu0
        %v2213 = vadd.f32 0.0, %v2212
        %2214 = vmatmul.bf16.gmra.mxu0 %v922
        %v2215 = vpop.f32.mrf.mxu0
        %v2216 = vadd.f32 0.0, %v2215
        %v2217 = vpop.f32.mrf.mxu0
        %v2218 = vadd.f32 0.0, %v2217
        %2219 = vmatmul.bf16.gmra.mxu0 %v2112
        %v2220 = vpop.f32.mrf.mxu0
        %v2221 = vadd.f32 0.0, %v2220
        %v2222 = vpop.f32.mrf.mxu0
        %v2223 = vadd.f32 0.0, %v2222
        %2224 = vmatmul.bf16.gmra.mxu0 %v2114
        %v2225 = vpop.f32.mrf.mxu0
        %v2226 = vadd.f32 0.0, %v2225
        %v2227 = vpop.f32.mrf.mxu0
        %v2228 = vadd.f32 0.0, %v2227
        %2229 = vmatmul.bf16.gmra.mxu0 %v2116
        %v2230 = vpop.f32.mrf.mxu0
        %v2231 = vadd.f32 0.0, %v2230
        %v2232 = vpop.f32.mrf.mxu0
        %v2233 = vadd.f32 0.0, %v2232
        %2234 = vmatmul.bf16.gmra.mxu0 %v2118
        %v2235 = vpop.f32.mrf.mxu0
        %v2236 = vadd.f32 0.0, %v2235
        %v2237 = vpop.f32.mrf.mxu0
        %v2238 = vadd.f32 0.0, %v2237
        %2239 = vdwg.mxu0
        %v2240 = vadd.f32 %v2070, %v2181
        %v2241 = vadd.f32 %v2071, %v2183
        %v2242 = vadd.f32 %v2072, %v2186
        %v2243 = vadd.f32 %v2073, %v2188
        %v2244 = vadd.f32 %v2074, %v2191
        %v2245 = vadd.f32 %v2075, %v2193
        %v2246 = vadd.f32 %v2076, %v2196
        %v2247 = vadd.f32 %v2077, %v2198
        %v2248 = vadd.f32 %v2078, %v2201
        %v2249 = vadd.f32 %v2079, %v2203
        %v2250 = vadd.f32 %v2080, %v2206
        %v2251 = vadd.f32 %v2081, %v2208
        %v2252 = vadd.f32 %v2082, %v2211
        %v2253 = vadd.f32 %v2083, %v2213
        %v2254 = vadd.f32 %v2084, %v2216
        %v2255 = vadd.f32 %v2085, %v2218
        %v2256 = vadd.f32 %v2086, %v2221
        %v2257 = vadd.f32 %v2087, %v2223
        %v2258 = vadd.f32 %v2088, %v2226
        %v2259 = vadd.f32 %v2089, %v2228
        %v2260 = vadd.f32 %v2090, %v2231
        %v2261 = vadd.f32 %v2091, %v2233
        %v2262 = vadd.f32 %v2092, %v2236
        %v2263 = vadd.f32 %v2093, %v2238
        %v2264 = vld [vmem:[%s3] sm:$0x1]
        %v2266 = vperm.slane %v2264, 0
        %v2268 = vadd.f32 %v2240, %v2266
        %v2269 = vadd.f32 %v2241, %v2266
        %v2270 = vadd.f32 %v2242, %v2266
        %v2271 = vadd.f32 %v2243, %v2266
        %v2272 = vadd.f32 %v2244, %v2266
        %v2273 = vadd.f32 %v2245, %v2266
        %v2274 = vadd.f32 %v2246, %v2266
        %v2275 = vadd.f32 %v2247, %v2266
        %v2276 = vadd.f32 %v2248, %v2266
        %v2277 = vadd.f32 %v2249, %v2266
        %v2278 = vadd.f32 %v2250, %v2266
        %v2279 = vadd.f32 %v2251, %v2266
        %v2280 = vadd.f32 %v2252, %v2266
        %v2281 = vadd.f32 %v2253, %v2266
        %v2282 = vadd.f32 %v2254, %v2266
        %v2283 = vadd.f32 %v2255, %v2266
        %v2284 = vadd.f32 %v2256, %v2266
        %v2285 = vadd.f32 %v2257, %v2266
        %v2286 = vadd.f32 %v2258, %v2266
        %v2287 = vadd.f32 %v2259, %v2266
        %v2288 = vadd.f32 %v2260, %v2266
        %v2289 = vadd.f32 %v2261, %v2266
        %v2290 = vadd.f32 %v2262, %v2266
        %v2291 = vadd.f32 %v2263, %v2266
        %v2292 = vxor.u32 %v2268, 2147483648
        %v2293 = vxor.u32 %v2269, 2147483648
        %v2294 = vxor.u32 %v2270, 2147483648
        %v2295 = vxor.u32 %v2271, 2147483648
        %v2296 = vxor.u32 %v2272, 2147483648
        %v2297 = vxor.u32 %v2273, 2147483648
        %v2298 = vxor.u32 %v2274, 2147483648
        %v2299 = vxor.u32 %v2275, 2147483648
        %v2300 = vxor.u32 %v2276, 2147483648
        %v2301 = vxor.u32 %v2277, 2147483648
        %v2302 = vxor.u32 %v2278, 2147483648
        %v2303 = vxor.u32 %v2279, 2147483648
        %v2304 = vxor.u32 %v2280, 2147483648
        %v2305 = vxor.u32 %v2281, 2147483648
        %v2306 = vxor.u32 %v2282, 2147483648
        %v2307 = vxor.u32 %v2283, 2147483648
        %v2308 = vxor.u32 %v2284, 2147483648
        %v2309 = vxor.u32 %v2285, 2147483648
        %v2310 = vxor.u32 %v2286, 2147483648
        %v2311 = vxor.u32 %v2287, 2147483648
        %v2312 = vxor.u32 %v2288, 2147483648
        %v2313 = vxor.u32 %v2289, 2147483648
        %v2314 = vxor.u32 %v2290, 2147483648
        %v2315 = vxor.u32 %v2291, 2147483648
        %v2316 = vmul.f32 %v2292, 1.442695
        %v2317 = vpow.pop %v2316
        %v2318 = vmul.f32 %v2293, 1.442695
        %v2319 = vpow.pop %v2318
        %v2320 = vmul.f32 %v2294, 1.442695
        %v2321 = vpow.pop %v2320
        %v2322 = vmul.f32 %v2295, 1.442695
        %v2323 = vpow.pop %v2322
        %v2324 = vmul.f32 %v2296, 1.442695
        %v2325 = vpow.pop %v2324
        %v2326 = vmul.f32 %v2297, 1.442695
        %v2327 = vpow.pop %v2326
        %v2328 = vmul.f32 %v2298, 1.442695
        %v2329 = vpow.pop %v2328
        %v2330 = vmul.f32 %v2299, 1.442695
        %v2331 = vpow.pop %v2330
        %v2332 = vmul.f32 %v2300, 1.442695
        %v2333 = vpow.pop %v2332
        %v2334 = vmul.f32 %v2301, 1.442695
        %v2335 = vpow.pop %v2334
        %v2336 = vmul.f32 %v2302, 1.442695
        %v2337 = vpow.pop %v2336
        %v2338 = vmul.f32 %v2303, 1.442695
        %v2339 = vpow.pop %v2338
        %v2340 = vmul.f32 %v2304, 1.442695
        %v2341 = vpow.pop %v2340
        %v2342 = vmul.f32 %v2305, 1.442695
        %v2343 = vpow.pop %v2342
        %v2344 = vmul.f32 %v2306, 1.442695
        %v2345 = vpow.pop %v2344
        %v2346 = vmul.f32 %v2307, 1.442695
        %v2347 = vpow.pop %v2346
        %v2348 = vmul.f32 %v2308, 1.442695
        %v2349 = vpow.pop %v2348
        %v2350 = vmul.f32 %v2309, 1.442695
        %v2351 = vpow.pop %v2350
        %v2352 = vmul.f32 %v2310, 1.442695
        %v2353 = vpow.pop %v2352
        %v2354 = vmul.f32 %v2311, 1.442695
        %v2355 = vpow.pop %v2354
        %v2356 = vmul.f32 %v2312, 1.442695
        %v2357 = vpow.pop %v2356
        %v2358 = vmul.f32 %v2313, 1.442695
        %v2359 = vpow.pop %v2358
        %v2360 = vmul.f32 %v2314, 1.442695
        %v2361 = vpow.pop %v2360
        %v2362 = vmul.f32 %v2315, 1.442695
        %v2363 = vpow.pop %v2362
        %v2364 = vadd.f32 %v2317, 1.0
        %v2365 = vadd.f32 %v2319, 1.0
        %v2366 = vadd.f32 %v2321, 1.0
        %v2367 = vadd.f32 %v2323, 1.0
        %v2368 = vadd.f32 %v2325, 1.0
        %v2369 = vadd.f32 %v2327, 1.0
        %v2370 = vadd.f32 %v2329, 1.0
        %v2371 = vadd.f32 %v2331, 1.0
        %v2372 = vadd.f32 %v2333, 1.0
        %v2373 = vadd.f32 %v2335, 1.0
        %v2374 = vadd.f32 %v2337, 1.0
        %v2375 = vadd.f32 %v2339, 1.0
        %v2376 = vadd.f32 %v2341, 1.0
        %v2377 = vadd.f32 %v2343, 1.0
        %v2378 = vadd.f32 %v2345, 1.0
        %v2379 = vadd.f32 %v2347, 1.0
        %v2380 = vadd.f32 %v2349, 1.0
        %v2381 = vadd.f32 %v2351, 1.0
        %v2382 = vadd.f32 %v2353, 1.0
        %v2383 = vadd.f32 %v2355, 1.0
        %v2384 = vadd.f32 %v2357, 1.0
        %v2385 = vadd.f32 %v2359, 1.0
        %v2386 = vadd.f32 %v2361, 1.0
        %v2387 = vadd.f32 %v2363, 1.0
        %v2388 = vrcp.pop %v2364
        %v2389 = vmul.f32 %v2364, %v2388
        %v2390 = vsub.f32 1.0, %v2389
        %v2391 = vmul.f32 %v2388, %v2390
        %v2392 = vadd.f32 %v2388, %v2391
        %vm2393 = vweird.f32 %v2364
        %vm2394 = vweird.f32 %v2388
        %vm2395 = vmor %vm2393, %vm2394
        %v2396 = vsel %vm2395, %v2388, %v2392
        %v2397 = vand.u32 2147483647, %v2364
        %vm2398 = vcmp.eq.f32.partialorder %v2397, 8.507059e+37
        %v2399 = vand.u32 %v2364, 2147483648
        %v2400 = vor.u32 1.1754944e-38, %v2399
        %v2401 = vsel %vm2398, %v2400, %v2396
        %v2402 = vmul.f32 1.0, %v2401
        %v2403 = vrcp.pop %v2365
        %v2404 = vmul.f32 %v2365, %v2403
        %v2405 = vsub.f32 1.0, %v2404
        %v2406 = vmul.f32 %v2403, %v2405
        %v2407 = vadd.f32 %v2403, %v2406
        %vm2408 = vweird.f32 %v2365
        %vm2409 = vweird.f32 %v2403
        %vm2410 = vmor %vm2408, %vm2409
        %v2411 = vsel %vm2410, %v2403, %v2407
        %v2412 = vand.u32 2147483647, %v2365
        %vm2413 = vcmp.eq.f32.partialorder %v2412, 8.507059e+37
        %v2414 = vand.u32 %v2365, 2147483648
        %v2415 = vor.u32 1.1754944e-38, %v2414
        %v2416 = vsel %vm2413, %v2415, %v2411
        %v2417 = vmul.f32 1.0, %v2416
        %v2418 = vrcp.pop %v2366
        %v2419 = vmul.f32 %v2366, %v2418
        %v2420 = vsub.f32 1.0, %v2419
        %v2421 = vmul.f32 %v2418, %v2420
        %v2422 = vadd.f32 %v2418, %v2421
        %vm2423 = vweird.f32 %v2366
        %vm2424 = vweird.f32 %v2418
        %vm2425 = vmor %vm2423, %vm2424
        %v2426 = vsel %vm2425, %v2418, %v2422
        %v2427 = vand.u32 2147483647, %v2366
        %vm2428 = vcmp.eq.f32.partialorder %v2427, 8.507059e+37
        %v2429 = vand.u32 %v2366, 2147483648
        %v2430 = vor.u32 1.1754944e-38, %v2429
        %v2431 = vsel %vm2428, %v2430, %v2426
        %v2432 = vmul.f32 1.0, %v2431
        %v2433 = vrcp.pop %v2367
        %v2434 = vmul.f32 %v2367, %v2433
        %v2435 = vsub.f32 1.0, %v2434
        %v2436 = vmul.f32 %v2433, %v2435
        %v2437 = vadd.f32 %v2433, %v2436
        %vm2438 = vweird.f32 %v2367
        %vm2439 = vweird.f32 %v2433
        %vm2440 = vmor %vm2438, %vm2439
        %v2441 = vsel %vm2440, %v2433, %v2437
        %v2442 = vand.u32 2147483647, %v2367
        %vm2443 = vcmp.eq.f32.partialorder %v2442, 8.507059e+37
        %v2444 = vand.u32 %v2367, 2147483648
        %v2445 = vor.u32 1.1754944e-38, %v2444
        %v2446 = vsel %vm2443, %v2445, %v2441
        %v2447 = vmul.f32 1.0, %v2446
        %v2448 = vrcp.pop %v2368
        %v2449 = vmul.f32 %v2368, %v2448
        %v2450 = vsub.f32 1.0, %v2449
        %v2451 = vmul.f32 %v2448, %v2450
        %v2452 = vadd.f32 %v2448, %v2451
        %vm2453 = vweird.f32 %v2368
        %vm2454 = vweird.f32 %v2448
        %vm2455 = vmor %vm2453, %vm2454
        %v2456 = vsel %vm2455, %v2448, %v2452
        %v2457 = vand.u32 2147483647, %v2368
        %vm2458 = vcmp.eq.f32.partialorder %v2457, 8.507059e+37
        %v2459 = vand.u32 %v2368, 2147483648
        %v2460 = vor.u32 1.1754944e-38, %v2459
        %v2461 = vsel %vm2458, %v2460, %v2456
        %v2462 = vmul.f32 1.0, %v2461
        %v2463 = vrcp.pop %v2369
        %v2464 = vmul.f32 %v2369, %v2463
        %v2465 = vsub.f32 1.0, %v2464
        %v2466 = vmul.f32 %v2463, %v2465
        %v2467 = vadd.f32 %v2463, %v2466
        %vm2468 = vweird.f32 %v2369
        %vm2469 = vweird.f32 %v2463
        %vm2470 = vmor %vm2468, %vm2469
        %v2471 = vsel %vm2470, %v2463, %v2467
        %v2472 = vand.u32 2147483647, %v2369
        %vm2473 = vcmp.eq.f32.partialorder %v2472, 8.507059e+37
        %v2474 = vand.u32 %v2369, 2147483648
        %v2475 = vor.u32 1.1754944e-38, %v2474
        %v2476 = vsel %vm2473, %v2475, %v2471
        %v2477 = vmul.f32 1.0, %v2476
        %v2478 = vrcp.pop %v2370
        %v2479 = vmul.f32 %v2370, %v2478
        %v2480 = vsub.f32 1.0, %v2479
        %v2481 = vmul.f32 %v2478, %v2480
        %v2482 = vadd.f32 %v2478, %v2481
        %vm2483 = vweird.f32 %v2370
        %vm2484 = vweird.f32 %v2478
        %vm2485 = vmor %vm2483, %vm2484
        %v2486 = vsel %vm2485, %v2478, %v2482
        %v2487 = vand.u32 2147483647, %v2370
        %vm2488 = vcmp.eq.f32.partialorder %v2487, 8.507059e+37
        %v2489 = vand.u32 %v2370, 2147483648
        %v2490 = vor.u32 1.1754944e-38, %v2489
        %v2491 = vsel %vm2488, %v2490, %v2486
        %v2492 = vmul.f32 1.0, %v2491
        %v2493 = vrcp.pop %v2371
        %v2494 = vmul.f32 %v2371, %v2493
        %v2495 = vsub.f32 1.0, %v2494
        %v2496 = vmul.f32 %v2493, %v2495
        %v2497 = vadd.f32 %v2493, %v2496
        %vm2498 = vweird.f32 %v2371
        %vm2499 = vweird.f32 %v2493
        %vm2500 = vmor %vm2498, %vm2499
        %v2501 = vsel %vm2500, %v2493, %v2497
        %v2502 = vand.u32 2147483647, %v2371
        %vm2503 = vcmp.eq.f32.partialorder %v2502, 8.507059e+37
        %v2504 = vand.u32 %v2371, 2147483648
        %v2505 = vor.u32 1.1754944e-38, %v2504
        %v2506 = vsel %vm2503, %v2505, %v2501
        %v2507 = vmul.f32 1.0, %v2506
        %v2508 = vrcp.pop %v2372
        %v2509 = vmul.f32 %v2372, %v2508
        %v2510 = vsub.f32 1.0, %v2509
        %v2511 = vmul.f32 %v2508, %v2510
        %v2512 = vadd.f32 %v2508, %v2511
        %vm2513 = vweird.f32 %v2372
        %vm2514 = vweird.f32 %v2508
        %vm2515 = vmor %vm2513, %vm2514
        %v2516 = vsel %vm2515, %v2508, %v2512
        %v2517 = vand.u32 2147483647, %v2372
        %vm2518 = vcmp.eq.f32.partialorder %v2517, 8.507059e+37
        %v2519 = vand.u32 %v2372, 2147483648
        %v2520 = vor.u32 1.1754944e-38, %v2519
        %v2521 = vsel %vm2518, %v2520, %v2516
        %v2522 = vmul.f32 1.0, %v2521
        %v2523 = vrcp.pop %v2373
        %v2524 = vmul.f32 %v2373, %v2523
        %v2525 = vsub.f32 1.0, %v2524
        %v2526 = vmul.f32 %v2523, %v2525
        %v2527 = vadd.f32 %v2523, %v2526
        %vm2528 = vweird.f32 %v2373
        %vm2529 = vweird.f32 %v2523
        %vm2530 = vmor %vm2528, %vm2529
        %v2531 = vsel %vm2530, %v2523, %v2527
        %v2532 = vand.u32 2147483647, %v2373
        %vm2533 = vcmp.eq.f32.partialorder %v2532, 8.507059e+37
        %v2534 = vand.u32 %v2373, 2147483648
        %v2535 = vor.u32 1.1754944e-38, %v2534
        %v2536 = vsel %vm2533, %v2535, %v2531
        %v2537 = vmul.f32 1.0, %v2536
        %v2538 = vrcp.pop %v2374
        %v2539 = vmul.f32 %v2374, %v2538
        %v2540 = vsub.f32 1.0, %v2539
        %v2541 = vmul.f32 %v2538, %v2540
        %v2542 = vadd.f32 %v2538, %v2541
        %vm2543 = vweird.f32 %v2374
        %vm2544 = vweird.f32 %v2538
        %vm2545 = vmor %vm2543, %vm2544
        %v2546 = vsel %vm2545, %v2538, %v2542
        %v2547 = vand.u32 2147483647, %v2374
        %vm2548 = vcmp.eq.f32.partialorder %v2547, 8.507059e+37
        %v2549 = vand.u32 %v2374, 2147483648
        %v2550 = vor.u32 1.1754944e-38, %v2549
        %v2551 = vsel %vm2548, %v2550, %v2546
        %v2552 = vmul.f32 1.0, %v2551
        %v2553 = vrcp.pop %v2375
        %v2554 = vmul.f32 %v2375, %v2553
        %v2555 = vsub.f32 1.0, %v2554
        %v2556 = vmul.f32 %v2553, %v2555
        %v2557 = vadd.f32 %v2553, %v2556
        %vm2558 = vweird.f32 %v2375
        %vm2559 = vweird.f32 %v2553
        %vm2560 = vmor %vm2558, %vm2559
        %v2561 = vsel %vm2560, %v2553, %v2557
        %v2562 = vand.u32 2147483647, %v2375
        %vm2563 = vcmp.eq.f32.partialorder %v2562, 8.507059e+37
        %v2564 = vand.u32 %v2375, 2147483648
        %v2565 = vor.u32 1.1754944e-38, %v2564
        %v2566 = vsel %vm2563, %v2565, %v2561
        %v2567 = vmul.f32 1.0, %v2566
        %v2568 = vrcp.pop %v2376
        %v2569 = vmul.f32 %v2376, %v2568
        %v2570 = vsub.f32 1.0, %v2569
        %v2571 = vmul.f32 %v2568, %v2570
        %v2572 = vadd.f32 %v2568, %v2571
        %vm2573 = vweird.f32 %v2376
        %vm2574 = vweird.f32 %v2568
        %vm2575 = vmor %vm2573, %vm2574
        %v2576 = vsel %vm2575, %v2568, %v2572
        %v2577 = vand.u32 2147483647, %v2376
        %vm2578 = vcmp.eq.f32.partialorder %v2577, 8.507059e+37
        %v2579 = vand.u32 %v2376, 2147483648
        %v2580 = vor.u32 1.1754944e-38, %v2579
        %v2581 = vsel %vm2578, %v2580, %v2576
        %v2582 = vmul.f32 1.0, %v2581
        %v2583 = vrcp.pop %v2377
        %v2584 = vmul.f32 %v2377, %v2583
        %v2585 = vsub.f32 1.0, %v2584
        %v2586 = vmul.f32 %v2583, %v2585
        %v2587 = vadd.f32 %v2583, %v2586
        %vm2588 = vweird.f32 %v2377
        %vm2589 = vweird.f32 %v2583
        %vm2590 = vmor %vm2588, %vm2589
        %v2591 = vsel %vm2590, %v2583, %v2587
        %v2592 = vand.u32 2147483647, %v2377
        %vm2593 = vcmp.eq.f32.partialorder %v2592, 8.507059e+37
        %v2594 = vand.u32 %v2377, 2147483648
        %v2595 = vor.u32 1.1754944e-38, %v2594
        %v2596 = vsel %vm2593, %v2595, %v2591
        %v2597 = vmul.f32 1.0, %v2596
        %v2598 = vrcp.pop %v2378
        %v2599 = vmul.f32 %v2378, %v2598
        %v2600 = vsub.f32 1.0, %v2599
        %v2601 = vmul.f32 %v2598, %v2600
        %v2602 = vadd.f32 %v2598, %v2601
        %vm2603 = vweird.f32 %v2378
        %vm2604 = vweird.f32 %v2598
        %vm2605 = vmor %vm2603, %vm2604
        %v2606 = vsel %vm2605, %v2598, %v2602
        %v2607 = vand.u32 2147483647, %v2378
        %vm2608 = vcmp.eq.f32.partialorder %v2607, 8.507059e+37
        %v2609 = vand.u32 %v2378, 2147483648
        %v2610 = vor.u32 1.1754944e-38, %v2609
        %v2611 = vsel %vm2608, %v2610, %v2606
        %v2612 = vmul.f32 1.0, %v2611
        %v2613 = vrcp.pop %v2379
        %v2614 = vmul.f32 %v2379, %v2613
        %v2615 = vsub.f32 1.0, %v2614
        %v2616 = vmul.f32 %v2613, %v2615
        %v2617 = vadd.f32 %v2613, %v2616
        %vm2618 = vweird.f32 %v2379
        %vm2619 = vweird.f32 %v2613
        %vm2620 = vmor %vm2618, %vm2619
        %v2621 = vsel %vm2620, %v2613, %v2617
        %v2622 = vand.u32 2147483647, %v2379
        %vm2623 = vcmp.eq.f32.partialorder %v2622, 8.507059e+37
        %v2624 = vand.u32 %v2379, 2147483648
        %v2625 = vor.u32 1.1754944e-38, %v2624
        %v2626 = vsel %vm2623, %v2625, %v2621
        %v2627 = vmul.f32 1.0, %v2626
        %v2628 = vrcp.pop %v2380
        %v2629 = vmul.f32 %v2380, %v2628
        %v2630 = vsub.f32 1.0, %v2629
        %v2631 = vmul.f32 %v2628, %v2630
        %v2632 = vadd.f32 %v2628, %v2631
        %vm2633 = vweird.f32 %v2380
        %vm2634 = vweird.f32 %v2628
        %vm2635 = vmor %vm2633, %vm2634
        %v2636 = vsel %vm2635, %v2628, %v2632
        %v2637 = vand.u32 2147483647, %v2380
        %vm2638 = vcmp.eq.f32.partialorder %v2637, 8.507059e+37
        %v2639 = vand.u32 %v2380, 2147483648
        %v2640 = vor.u32 1.1754944e-38, %v2639
        %v2641 = vsel %vm2638, %v2640, %v2636
        %v2642 = vmul.f32 1.0, %v2641
        %v2643 = vrcp.pop %v2381
        %v2644 = vmul.f32 %v2381, %v2643
        %v2645 = vsub.f32 1.0, %v2644
        %v2646 = vmul.f32 %v2643, %v2645
        %v2647 = vadd.f32 %v2643, %v2646
        %vm2648 = vweird.f32 %v2381
        %vm2649 = vweird.f32 %v2643
        %vm2650 = vmor %vm2648, %vm2649
        %v2651 = vsel %vm2650, %v2643, %v2647
        %v2652 = vand.u32 2147483647, %v2381
        %vm2653 = vcmp.eq.f32.partialorder %v2652, 8.507059e+37
        %v2654 = vand.u32 %v2381, 2147483648
        %v2655 = vor.u32 1.1754944e-38, %v2654
        %v2656 = vsel %vm2653, %v2655, %v2651
        %v2657 = vmul.f32 1.0, %v2656
        %v2658 = vrcp.pop %v2382
        %v2659 = vmul.f32 %v2382, %v2658
        %v2660 = vsub.f32 1.0, %v2659
        %v2661 = vmul.f32 %v2658, %v2660
        %v2662 = vadd.f32 %v2658, %v2661
        %vm2663 = vweird.f32 %v2382
        %vm2664 = vweird.f32 %v2658
        %vm2665 = vmor %vm2663, %vm2664
        %v2666 = vsel %vm2665, %v2658, %v2662
        %v2667 = vand.u32 2147483647, %v2382
        %vm2668 = vcmp.eq.f32.partialorder %v2667, 8.507059e+37
        %v2669 = vand.u32 %v2382, 2147483648
        %v2670 = vor.u32 1.1754944e-38, %v2669
        %v2671 = vsel %vm2668, %v2670, %v2666
        %v2672 = vmul.f32 1.0, %v2671
        %v2673 = vrcp.pop %v2383
        %v2674 = vmul.f32 %v2383, %v2673
        %v2675 = vsub.f32 1.0, %v2674
        %v2676 = vmul.f32 %v2673, %v2675
        %v2677 = vadd.f32 %v2673, %v2676
        %vm2678 = vweird.f32 %v2383
        %vm2679 = vweird.f32 %v2673
        %vm2680 = vmor %vm2678, %vm2679
        %v2681 = vsel %vm2680, %v2673, %v2677
        %v2682 = vand.u32 2147483647, %v2383
        %vm2683 = vcmp.eq.f32.partialorder %v2682, 8.507059e+37
        %v2684 = vand.u32 %v2383, 2147483648
        %v2685 = vor.u32 1.1754944e-38, %v2684
        %v2686 = vsel %vm2683, %v2685, %v2681
        %v2687 = vmul.f32 1.0, %v2686
        %v2688 = vrcp.pop %v2384
        %v2689 = vmul.f32 %v2384, %v2688
        %v2690 = vsub.f32 1.0, %v2689
        %v2691 = vmul.f32 %v2688, %v2690
        %v2692 = vadd.f32 %v2688, %v2691
        %vm2693 = vweird.f32 %v2384
        %vm2694 = vweird.f32 %v2688
        %vm2695 = vmor %vm2693, %vm2694
        %v2696 = vsel %vm2695, %v2688, %v2692
        %v2697 = vand.u32 2147483647, %v2384
        %vm2698 = vcmp.eq.f32.partialorder %v2697, 8.507059e+37
        %v2699 = vand.u32 %v2384, 2147483648
        %v2700 = vor.u32 1.1754944e-38, %v2699
        %v2701 = vsel %vm2698, %v2700, %v2696
        %v2702 = vmul.f32 1.0, %v2701
        %v2703 = vrcp.pop %v2385
        %v2704 = vmul.f32 %v2385, %v2703
        %v2705 = vsub.f32 1.0, %v2704
        %v2706 = vmul.f32 %v2703, %v2705
        %v2707 = vadd.f32 %v2703, %v2706
        %vm2708 = vweird.f32 %v2385
        %vm2709 = vweird.f32 %v2703
        %vm2710 = vmor %vm2708, %vm2709
        %v2711 = vsel %vm2710, %v2703, %v2707
        %v2712 = vand.u32 2147483647, %v2385
        %vm2713 = vcmp.eq.f32.partialorder %v2712, 8.507059e+37
        %v2714 = vand.u32 %v2385, 2147483648
        %v2715 = vor.u32 1.1754944e-38, %v2714
        %v2716 = vsel %vm2713, %v2715, %v2711
        %v2717 = vmul.f32 1.0, %v2716
        %v2718 = vrcp.pop %v2386
        %v2719 = vmul.f32 %v2386, %v2718
        %v2720 = vsub.f32 1.0, %v2719
        %v2721 = vmul.f32 %v2718, %v2720
        %v2722 = vadd.f32 %v2718, %v2721
        %vm2723 = vweird.f32 %v2386
        %vm2724 = vweird.f32 %v2718
        %vm2725 = vmor %vm2723, %vm2724
        %v2726 = vsel %vm2725, %v2718, %v2722
        %v2727 = vand.u32 2147483647, %v2386
        %vm2728 = vcmp.eq.f32.partialorder %v2727, 8.507059e+37
        %v2729 = vand.u32 %v2386, 2147483648
        %v2730 = vor.u32 1.1754944e-38, %v2729
        %v2731 = vsel %vm2728, %v2730, %v2726
        %v2732 = vmul.f32 1.0, %v2731
        %v2733 = vrcp.pop %v2387
        %v2734 = vmul.f32 %v2387, %v2733
        %v2735 = vsub.f32 1.0, %v2734
        %v2736 = vmul.f32 %v2733, %v2735
        %v2737 = vadd.f32 %v2733, %v2736
        %vm2738 = vweird.f32 %v2387
        %vm2739 = vweird.f32 %v2733
        %vm2740 = vmor %vm2738, %vm2739
        %v2741 = vsel %vm2740, %v2733, %v2737
        %v2742 = vand.u32 2147483647, %v2387
        %vm2743 = vcmp.eq.f32.partialorder %v2742, 8.507059e+37
        %v2744 = vand.u32 %v2387, 2147483648
        %v2745 = vor.u32 1.1754944e-38, %v2744
        %v2746 = vsel %vm2743, %v2745, %v2741
        %v2747 = vmul.f32 1.0, %v2746
        %v2748 = vmul.f32 %v2268, %v2402
        %v2749 = vmul.f32 %v2269, %v2417
        %v2750 = vmul.f32 %v2270, %v2432
        %v2751 = vmul.f32 %v2271, %v2447
        %v2752 = vmul.f32 %v2272, %v2462
        %v2753 = vmul.f32 %v2273, %v2477
        %v2754 = vmul.f32 %v2274, %v2492
        %v2755 = vmul.f32 %v2275, %v2507
        %v2756 = vmul.f32 %v2276, %v2522
        %v2757 = vmul.f32 %v2277, %v2537
        %v2758 = vmul.f32 %v2278, %v2552
        %v2759 = vmul.f32 %v2279, %v2567
        %v2760 = vmul.f32 %v2280, %v2582
        %v2761 = vmul.f32 %v2281, %v2597
        %v2762 = vmul.f32 %v2282, %v2612
        %v2763 = vmul.f32 %v2283, %v2627
        %v2764 = vmul.f32 %v2284, %v2642
        %v2765 = vmul.f32 %v2285, %v2657
        %v2766 = vmul.f32 %v2286, %v2672
        %v2767 = vmul.f32 %v2287, %v2687
        %v2768 = vmul.f32 %v2288, %v2702
        %v2769 = vmul.f32 %v2289, %v2717
        %v2770 = vmul.f32 %v2290, %v2732
        %v2771 = vmul.f32 %v2291, %v2747
        %v2772 = vpack.c.bf16 %v2749, %v2748
        %v2773 = vpack.c.bf16 %v2751, %v2750
        %v2774 = vpack.c.bf16 %v2753, %v2752
        %v2775 = vpack.c.bf16 %v2755, %v2754
        %v2776 = vpack.c.bf16 %v2757, %v2756
        %v2777 = vpack.c.bf16 %v2759, %v2758
        %v2778 = vpack.c.bf16 %v2761, %v2760
        %v2779 = vpack.c.bf16 %v2763, %v2762
        %v2780 = vpack.c.bf16 %v2765, %v2764
        %v2781 = vpack.c.bf16 %v2767, %v2766
        %v2782 = vpack.c.bf16 %v2769, %v2768
        %v2783 = vpack.c.bf16 %v2771, %v2770
        %v2784 = vld [vmem:[#allocation8] sm:$0xf]
        %v2785 = vld [vmem:[#allocation8 + $0x4] sm:$0xf]
        %v2786 = vld [vmem:[#allocation8 + $0x8] sm:$0xf]
        %v2787 = vld [vmem:[#allocation8 + $0xc] sm:$0xf]
        %v2788 = vld [vmem:[#allocation8 + $0x10] sm:$0xf]
        %v2789 = vld [vmem:[#allocation8 + $0x14] sm:$0xf]
        %v2790 = vld [vmem:[#allocation8 + $0x18] sm:$0xf]
        %v2791 = vld [vmem:[#allocation8 + $0x1c] sm:$0xf]
        %v2792 = vld [vmem:[#allocation8 + $0x20] sm:$0xf]
        %v2793 = vld [vmem:[#allocation8 + $0x24] sm:$0xf]
        %v2794 = vld [vmem:[#allocation8 + $0x28] sm:$0xf]
        %v2795 = vld [vmem:[#allocation8 + $0x2c] sm:$0xf]
        %v2796 = vld [vmem:[#allocation8 + $0x30] sm:$0xf]
        %v2797 = vld [vmem:[#allocation8 + $0x34] sm:$0xf]
        %v2798 = vld [vmem:[#allocation8 + $0x38] sm:$0xf]
        %v2799 = vld [vmem:[#allocation8 + $0x3c] sm:$0xf]
        %v2800 = vld [vmem:[%s5] sm:$0x1]
        %v2802 = vperm.slane %v2800, 0
        %v2820 = vunpack.c.l.b16 %v2784
        %v2821 = vunpack.c.l.b16 %v2785
        %v2822 = vunpack.c.l.b16 %v2786
        %v2823 = vunpack.c.l.b16 %v2787
        %v2824 = vunpack.c.l.b16 %v2788
        %v2825 = vunpack.c.l.b16 %v2789
        %v2826 = vunpack.c.l.b16 %v2790
        %v2827 = vunpack.c.l.b16 %v2791
        %v2828 = vunpack.c.l.b16 %v2792
        %v2829 = vunpack.c.l.b16 %v2793
        %v2830 = vunpack.c.l.b16 %v2794
        %v2831 = vunpack.c.l.b16 %v2795
        %v2832 = vunpack.c.l.b16 %v2796
        %v2833 = vunpack.c.l.b16 %v2797
        %v2834 = vunpack.c.l.b16 %v2798
        %v2835 = vunpack.c.l.b16 %v2799
        %v2836 = vpack.c.b16 %v2821, %v2820
        %v2837 = vpack.c.b16 %v2823, %v2822
        %v2838 = vpack.c.b16 %v2825, %v2824
        %v2839 = vpack.c.b16 %v2827, %v2826
        %v2840 = vpack.c.b16 %v2829, %v2828
        %v2841 = vpack.c.b16 %v2831, %v2830
        %v2842 = vpack.c.b16 %v2833, %v2832
        %v2843 = vpack.c.b16 %v2835, %v2834
        %2852 = vmatpush.bf16.msra.mxu0 %v2843
        %2853 = vmatpush.bf16.msra.mxu0 %v2842
        %2854 = vmatpush.bf16.msra.mxu0 %v2841
        %2855 = vmatpush.bf16.msra.mxu0 %v2840
        %2856 = vmatpush.bf16.msra.mxu0 %v2839
        %2857 = vmatpush.bf16.msra.mxu0 %v2838
        %2858 = vmatpush.bf16.msra.mxu0 %v2837
        %2859 = vmatpush.bf16.msra.mxu0 %v2836
        %2860 = vmatmul.bf16.gmra.mxu0 %v2772
        %v2861 = vpop.f32.mrf.mxu0
        %v2862 = vadd.f32 %v2802, %v2861
        %v2863 = vpop.f32.mrf.mxu0
        %v2864 = vadd.f32 %v2802, %v2863
        %2865 = vmatmul.bf16.gmra.mxu0 %v2773
        %v2866 = vpop.f32.mrf.mxu0
        %v2867 = vpop.f32.mrf.mxu0
        %v2868 = vadd.f32 %v2802, %v2867
        %2869 = vmatmul.bf16.gmra.mxu0 %v2774
        %v2870 = vpop.f32.mrf.mxu0
        %v2871 = vadd.f32 %v2802, %v2870
        %v2872 = vpop.f32.mrf.mxu0
        %2873 = vmatmul.bf16.gmra.mxu0 %v2775
        %v2874 = vpop.f32.mrf.mxu0
        %v2875 = vadd.f32 %v2802, %v2874
        %v2876 = vpop.f32.mrf.mxu0
        %v2877 = vadd.f32 %v2802, %v2876
        %2878 = vmatmul.bf16.gmra.mxu0 %v2776
        %v2879 = vpop.f32.mrf.mxu0
        %v2880 = vpop.f32.mrf.mxu0
        %v2881 = vadd.f32 %v2802, %v2880
        %2882 = vmatmul.bf16.gmra.mxu0 %v2777
        %v2883 = vpop.f32.mrf.mxu0
        %v2884 = vadd.f32 %v2802, %v2883
        %v2885 = vpop.f32.mrf.mxu0
        %2886 = vmatmul.bf16.gmra.mxu0 %v2778
        %v2887 = vpop.f32.mrf.mxu0
        %v2888 = vadd.f32 %v2802, %v2887
        %v2889 = vpop.f32.mrf.mxu0
        %v2890 = vadd.f32 %v2802, %v2889
        %2891 = vmatmul.bf16.gmra.mxu0 %v2779
        %v2892 = vpop.f32.mrf.mxu0
        %v2893 = vpop.f32.mrf.mxu0
        %v2894 = vadd.f32 %v2802, %v2893
        %2895 = vmatmul.bf16.gmra.mxu0 %v2780
        %v2896 = vpop.f32.mrf.mxu0
        %v2897 = vadd.f32 %v2802, %v2896
        %v2898 = vpop.f32.mrf.mxu0
        %2899 = vmatmul.bf16.gmra.mxu0 %v2781
        %v2900 = vpop.f32.mrf.mxu0
        %v2901 = vadd.f32 %v2802, %v2900
        %v2902 = vpop.f32.mrf.mxu0
        %v2903 = vadd.f32 %v2802, %v2902
        %2904 = vmatmul.bf16.gmra.mxu0 %v2782
        %v2905 = vpop.f32.mrf.mxu0
        %v2906 = vpop.f32.mrf.mxu0
        %v2907 = vadd.f32 %v2802, %v2906
        %2908 = vmatmul.bf16.gmra.mxu0 %v2783
        %v2909 = vpop.f32.mrf.mxu0
        %v2910 = vadd.f32 %v2802, %v2909
        %v2911 = vpop.f32.mrf.mxu0
        %2912 = vdwg.mxu0
        %v2913 = vunpack.c.l.bf16 %v400
        %v2914 = vunpack.c.l.bf16 %v401
        %v2915 = vunpack.c.l.bf16 %v402
        %v2916 = vunpack.c.l.bf16 %v403
        %v2917 = vunpack.c.l.bf16 %v404
        %v2918 = vunpack.c.l.bf16 %v405
        %v2919 = vunpack.c.l.bf16 %v406
        %v2920 = vunpack.c.l.bf16 %v407
        %v2921 = vunpack.c.l.bf16 %v408
        %v2922 = vunpack.c.l.bf16 %v409
        %v2923 = vunpack.c.l.bf16 %v410
        %v2924 = vunpack.c.l.bf16 %v411
        %v2925 = vunpack.c.l.bf16 %v412
        %v2926 = vunpack.c.l.bf16 %v413
        %v2927 = vunpack.c.l.bf16 %v414
        %v2928 = vunpack.c.l.bf16 %v415
        %v2929 = vunpack.c.l.bf16 %v416
        %v2930 = vunpack.c.l.bf16 %v417
        %v2931 = vunpack.c.l.bf16 %v418
        %v2932 = vunpack.c.l.bf16 %v419
        %v2933 = vunpack.c.l.bf16 %v420
        %v2934 = vunpack.c.l.bf16 %v421
        %v2935 = vunpack.c.l.bf16 %v422
        %v2936 = vunpack.c.l.bf16 %v423
        %vm2961 = vcmask 1046528
        %v2962 = vrot.slane %v2913, 1
        %v2963 = vrot.slane %v2914, 1
        %v2964 = vsel %vm2961, %v2962, %v2963
        %v2965 = vrot.slane %v2915, 1
        %v2966 = vsel %vm2961, %v2963, %v2965
        %v2967 = vrot.slane %v2916, 1
        %v2968 = vrot.slane %v2917, 1
        %v2969 = vsel %vm2961, %v2967, %v2968
        %v2970 = vrot.slane %v2918, 1
        %v2971 = vsel %vm2961, %v2968, %v2970
        %v2972 = vrot.slane %v2919, 1
        %v2973 = vrot.slane %v2920, 1
        %v2974 = vsel %vm2961, %v2972, %v2973
        %v2975 = vrot.slane %v2921, 1
        %v2976 = vsel %vm2961, %v2973, %v2975
        %v2977 = vrot.slane %v2922, 1
        %v2978 = vrot.slane %v2923, 1
        %v2979 = vsel %vm2961, %v2977, %v2978
        %v2980 = vrot.slane %v2924, 1
        %v2981 = vsel %vm2961, %v2978, %v2980
        %v2982 = vrot.slane %v2925, 1
        %v2983 = vrot.slane %v2926, 1
        %v2984 = vsel %vm2961, %v2982, %v2983
        %v2985 = vrot.slane %v2927, 1
        %v2986 = vsel %vm2961, %v2983, %v2985
        %v2987 = vrot.slane %v2928, 1
        %v2988 = vrot.slane %v2929, 1
        %v2989 = vsel %vm2961, %v2987, %v2988
        %v2990 = vrot.slane %v2930, 1
        %v2991 = vsel %vm2961, %v2988, %v2990
        %v2992 = vrot.slane %v2931, 1
        %v2993 = vrot.slane %v2932, 1
        %v2994 = vsel %vm2961, %v2992, %v2993
        %v2995 = vrot.slane %v2933, 1
        %v2996 = vsel %vm2961, %v2993, %v2995
        %v2997 = vrot.slane %v2934, 1
        %v2998 = vrot.slane %v2935, 1
        %v2999 = vsel %vm2961, %v2997, %v2998
        %v3000 = vrot.slane %v2936, 1
        %v3001 = vsel %vm2961, %v2998, %v3000
        %v3018 = vadd.f32 %v2862, %v2964
        %v3019 = vadd.f32 %v2864, %v2966
        %v3020 = vadd.f32 %v2868, %v2969
        %v3021 = vadd.f32 %v2871, %v2971
        %v3022 = vadd.f32 %v2875, %v2974
        %v3023 = vadd.f32 %v2877, %v2976
        %v3024 = vadd.f32 %v2881, %v2979
        %v3025 = vadd.f32 %v2884, %v2981
        %v3026 = vadd.f32 %v2888, %v2984
        %v3027 = vadd.f32 %v2890, %v2986
        %v3028 = vadd.f32 %v2894, %v2989
        %v3029 = vadd.f32 %v2897, %v2991
        %v3030 = vadd.f32 %v2901, %v2994
        %v3031 = vadd.f32 %v2903, %v2996
        %v3032 = vadd.f32 %v2907, %v2999
        %v3033 = vadd.f32 %v2910, %v3001
        %v3034 = vpack.c.bf16 %v3018, %v3018
        %v3035 = vpack.c.bf16 %v3019, %v3019
        %v3036 = vpack.c.bf16 %v3020, %v3020
        %v3037 = vpack.c.bf16 %v3021, %v3021
        %v3038 = vpack.c.bf16 %v3022, %v3022
        %v3039 = vpack.c.bf16 %v3023, %v3023
        %v3040 = vpack.c.bf16 %v3024, %v3024
        %v3041 = vpack.c.bf16 %v3025, %v3025
        %v3042 = vpack.c.bf16 %v3026, %v3026
        %v3043 = vpack.c.bf16 %v3027, %v3027
        %v3044 = vpack.c.bf16 %v3028, %v3028
        %v3045 = vpack.c.bf16 %v3029, %v3029
        %v3046 = vpack.c.bf16 %v3030, %v3030
        %v3047 = vpack.c.bf16 %v3031, %v3031
        %v3048 = vpack.c.bf16 %v3032, %v3032
        %v3049 = vpack.c.bf16 %v3033, %v3033
        %3050 = vst [vmem:[%s385] sm:$0xf] %v3034
        %3051 = vst [vmem:[%s385 + $0x4] sm:$0xf] %v3035
        %3052 = vst [vmem:[%s385 + $0x8] sm:$0xf] %v3036
        %3053 = vst [vmem:[%s385 + $0xc] sm:$0xf] %v3037
        %3054 = vst [vmem:[%s385 + $0x10] sm:$0xf] %v3038
        %3055 = vst [vmem:[%s385 + $0x14] sm:$0xf] %v3039
        %3056 = vst [vmem:[%s385 + $0x18] sm:$0xf] %v3040
        %3057 = vst [vmem:[%s385 + $0x1c] sm:$0xf] %v3041
        %3058 = vst [vmem:[%s385 + $0x20] sm:$0xf] %v3042
        %3059 = vst [vmem:[%s385 + $0x24] sm:$0xf] %v3043
        %3060 = vst [vmem:[%s385 + $0x28] sm:$0xf] %v3044
        %3061 = vst [vmem:[%s385 + $0x2c] sm:$0xf] %v3045
        %3062 = vst [vmem:[%s385 + $0x30] sm:$0xf] %v3046
        %3063 = vst [vmem:[%s385 + $0x34] sm:$0xf] %v3047
        %3064 = vst [vmem:[%s385 + $0x38] sm:$0xf] %v3048
        %3065 = vst [vmem:[%s385 + $0x3c] sm:$0xf] %v3049
        %s3066 = sand.u32 %s193, 1
        %s3067 = scalar_lea.sflag [#allocation4], %s3066
        %s3068 = sand.u32 %s193, 1
        %s3069 = smul.addr %s3068, 64
        %s3070 = scalar_lea.vmem [#allocation10], %s3069
        // Predicated region
        $region61: #{tpu_custom_call.1} parent=43 // pred_check
          %p3071 = pneg %p203
        $region62: #{tpu_custom_call.1} parent=43 // pred_check_branch
          %3073 = sbr.rel (%p3071) target = $region64
        $region63: #{tpu_custom_call.1} parent=43 // pred_region
          %s3074 = smul.u32 8, %s32
          %3076 = vsyncadd %s3067, 0
          %s3077 = smul.addr %s3074, 2
          %s3078 = smul.addr %s31, 32
          %s3079 = sadd.s32 %s3077, %s3078
          %s3080 = smul.addr %s3079, 4
          %s3081 = scalar_lea.hbm %s6, %s3080
          %s3082 = sshll.u32 %s3070, 4
          %s3083 = int_to_ptr.vmem [resolvable:$true] %s3082
          %s3084 = sshll.u32 %s3081, 4
          %s3085 = int_to_ptr.hbm [resolvable:$true] %s3084
          %3090 = dma.vmem_to_hbm [thread:$0]  %s3083, 1024, %s3085, %s3067, 64, 64, 4
        $region64: #{tpu_custom_call.1} parent=43 // pred_fallthru
          _
      $region44: #{tpu_custom_call.1} parent=5 // pred_fallthru
        _
      %p3091 = scmp.le.s32.totalorder 2, %s22
      // Predicated region
      $region65: #{tpu_custom_call.1} parent=5 // pred_check
        %p3092 = pneg %p3091
      $region66: #{tpu_custom_call.1} parent=5 // pred_check_branch
        %3094 = sbr.rel (%p3092) target = $region68
      $region67: #{tpu_custom_call.1} parent=5 // pred_region
        %s3095 = ssub.s32 %s22, 2
        // Predicated region
        $region69: #{tpu_custom_call.1} parent=67 // pred_check
          %p3096 = pneg %p209
        $region70: #{tpu_custom_call.1} parent=67 // pred_check_branch
          %3098 = sbr.rel (%p3096) target = $region72
        $region71: #{tpu_custom_call.1} parent=67 // pred_region
          %s3099 = sand.u32 %s194, 1
          %s3100 = scalar_lea.sflag [#allocation4], %s3099
          %s3101 = sand.u32 %s194, 1
          %s3102 = smul.addr %s3101, 64
          %s3103 = scalar_lea.vmem [#allocation10], %s3102
          %3105 = dma.done %s3100, 1024
        $region72: #{tpu_custom_call.1} parent=67 // pred_fallthru
          _
      $region68: #{tpu_custom_call.1} parent=5 // pred_fallthru
        _
    $region6: #{tpu_custom_call.1} parent=1 // loop_footer
      %s26 = sadd.s32 1, %s22
    $region7: #{tpu_custom_call.1} parent=1 // loop_footer_branch
      %21 = sbr.rel target = $region3
    $region8: #{tpu_custom_call.1} parent=1 // loop_exit
      _
    %3106 = vsyncpa [#allocation3], 1
    %s3107 = scalar_lea.sflag [#allocation3], 1
    %3108 = vsyncpa %s3107, 1
    %3109 = vsyncpa [#allocation6], 1
    %s3110 = scalar_lea.sflag [#allocation6], 1
    %3111 = vsyncpa %s3110, 1
    %3112 = vsyncpa [#allocation9], 1
    %3113 = vsyncpa [#allocation4], 1
    %s3114 = scalar_lea.sflag [#allocation4], 1
    %3115 = vsyncpa %s3114, 1

</llo_original>
